<compile_context>
chip_gen: v5e
topology: v5e:2x2
jax: 0.10.0
libtpu: 0.0.40
codegen_flags: <defaults>
</compile_context>

<pallas_src>
import functools
import math

import jax
import jax.numpy as jnp
from jax.experimental import pallas as pl
from jax.experimental.pallas import tpu as pltpu

# ----------------------------- small BERT config -----------------------------
B, S = 2, 8           # batch, sequence length
H = 128               # hidden size
NH, HD = 2, 64        # heads, head dim  (NH*HD == H)
I = 256               # intermediate (FFN) size
L = 2                 # encoder layers
VOCAB, MAXPOS = 100, 32
LN_EPS = 1e-12
NEG_INF = -1e9


# ------------------------------ in-kernel helpers -----------------------------
def _gelu_tanh(x):
    # TODO(synk): PyTorch BERT uses erf-GELU; erf has no clean Mosaic lowering,
    # so the tanh approximation is used (~1e-3 deviation).
    c = math.sqrt(2.0 / math.pi)
    return 0.5 * x * (1.0 + jnp.tanh(c * (x + 0.044715 * x * x * x)))


def _layernorm_f32(x, g, b, eps):
    x = x.astype(jnp.float32)
    mu = jnp.mean(x, axis=-1, keepdims=True)
    xc = x - mu
    var = jnp.mean(xc * xc, axis=-1, keepdims=True)
    return (xc * jax.lax.rsqrt(var + eps)) * g + b


# ------------------------------- fused kernel ---------------------------------
def _bert_fused_kernel(
        emb_ref, bias_ref, emb_g_ref, emb_b_ref,
        wqkv_ref, bqkv_ref, wo_ref, bo_ref, ln1_g_ref, ln1_b_ref,
        w1_ref, b1_ref, w2_ref, b2_ref, ln2_g_ref, ln2_b_ref,
        pool_w_ref, pool_b_ref, proj_w_ref, proj_b_ref,
        out_ref, ctx_scr, x_scr,
        *, layers, batch, seq, nheads, hdim, eps):
    hsz = nheads * hdim
    scale = 1.0 / math.sqrt(hdim)
    bias = bias_ref[...]                                # (B*S, B*S) block-diag mask

    # embedding LayerNorm -> bf16 resident activation (value, stays in VMEM/vregs)
    x = _layernorm_f32(emb_ref[...], emb_g_ref[...], emb_b_ref[...],
                       eps).astype(jnp.bfloat16)

    for l in range(layers):                             # weights fully resident
        # ---- attention block: fused QKV matmul -> batched per-head attention
        qkv = jnp.dot(x, wqkv_ref[l],
                      preferred_element_type=jnp.float32) + bqkv_ref[l]   # (B*S, 3H)
        for h in range(nheads):
            c0 = h * hdim
            qh = qkv[:, c0:c0 + hdim].astype(jnp.bfloat16)
            kh = qkv[:, hsz + c0:hsz + c0 + hdim].astype(jnp.bfloat16)
            vh = qkv[:, 2 * hsz + c0:2 * hsz + c0 + hdim].astype(jnp.bfloat16)
            # scores over all (batch,query,key) at once; cross-batch masked out
            s = jax.lax.dot_general(qh, kh, (((1,), (1,)), ((), ())),
                                    preferred_element_type=jnp.float32)
            s = s * scale + bias
            s = s - jnp.max(s, axis=-1, keepdims=True)
            p = jnp.exp(s)
            p = p / jnp.sum(p, axis=-1, keepdims=True)          # exact normalize
            ctx_scr[:, c0:c0 + hdim] = jnp.dot(
                p.astype(jnp.bfloat16), vh,
                preferred_element_type=jnp.float32).astype(jnp.bfloat16)
        attn_out = jnp.dot(ctx_scr[...], wo_ref[l],
                           preferred_element_type=jnp.float32) + bo_ref[l]
        x = _layernorm_f32(attn_out + x.astype(jnp.float32),
                           ln1_g_ref[l], ln1_b_ref[l], eps).astype(jnp.bfloat16)

        # ---- FFN block: W1 + gelu -> W2 -> residual + LN
        h1 = _gelu_tanh(jnp.dot(x, w1_ref[l],
                                preferred_element_type=jnp.float32) + b1_ref[l])
        h2 = jnp.dot(h1.astype(jnp.bfloat16), w2_ref[l],
                     preferred_element_type=jnp.float32) + b2_ref[l]
        x = _layernorm_f32(h2 + x.astype(jnp.float32),
                           ln2_g_ref[l], ln2_b_ref[l], eps).astype(jnp.bfloat16)

    # ---- pooler on [CLS] rows + Linear(H,1) + 5*sigmoid
    x_scr[...] = x.astype(jnp.float32)
    cls = x_scr[pl.ds(0, batch, stride=seq), :].astype(jnp.bfloat16)     # (B, H)
    t = jnp.tanh(jnp.dot(cls, pool_w_ref[...],
                         preferred_element_type=jnp.float32) + pool_b_ref[...])
    z = jnp.sum(t * proj_w_ref[...], axis=-1, keepdims=True) + proj_b_ref[...]
    # lane-dense output block; wrapper slices column 0
    out_ref[...] = jnp.broadcast_to(5.0 / (1.0 + jnp.exp(-z)), out_ref.shape)


# ------------------------------- parameters ----------------------------------
def init_params(key):
    keys = iter(jax.random.split(key, 16 + L * 8))
    nrm = lambda k, shp: 0.02 * jax.random.normal(k, shp, dtype=jnp.float32)
    bf = jnp.bfloat16
    p = {
        "word_emb": nrm(next(keys), (VOCAB, H)),
        "pos_emb": nrm(next(keys), (MAXPOS, H)),
        "type_emb": nrm(next(keys), (2, H)),
        "emb_ln_g": jnp.ones((1, H), jnp.float32),
        "emb_ln_b": jnp.zeros((1, H), jnp.float32),
        "pool_w": nrm(next(keys), (H, H)).astype(bf),
        "pool_b": jnp.zeros((1, H), jnp.float32),
        "proj_w": nrm(next(keys), (1, H)),          # Linear(H,1) as row vector
        "proj_b": jnp.zeros((1, 1), jnp.float32),
    }
    wqkv, wo, w1, w2 = [], [], [], []
    for _ in range(L):
        wq, wk, wv = (nrm(next(keys), (H, H)) for _ in range(3))
        wqkv.append(jnp.concatenate([wq, wk, wv], axis=1))        # fused [H, 3H]
        wo.append(nrm(next(keys), (H, H)))
        w1.append(nrm(next(keys), (H, I)))
        w2.append(nrm(next(keys), (I, H)))
    p["wqkv"] = jnp.stack(wqkv).astype(bf)                        # [L, H, 3H]
    p["bqkv"] = jnp.zeros((L, 1, 3 * H), jnp.float32)
    p["wo"] = jnp.stack(wo).astype(bf)                            # [L, H, H]
    p["bo"] = jnp.zeros((L, 1, H), jnp.float32)
    p["ln1_g"] = jnp.ones((L, 1, H), jnp.float32)
    p["ln1_b"] = jnp.zeros((L, 1, H), jnp.float32)
    p["w1"] = jnp.stack(w1).astype(bf)                            # [L, H, I]
    p["b1"] = jnp.zeros((L, 1, I), jnp.float32)
    p["w2"] = jnp.stack(w2).astype(bf)                            # [L, I, H]
    p["b2"] = jnp.zeros((L, 1, H), jnp.float32)
    p["ln2_g"] = jnp.ones((L, 1, H), jnp.float32)
    p["ln2_b"] = jnp.zeros((L, 1, H), jnp.float32)
    return p


# -------------------------------- forward pass --------------------------------
def bert_regressor_forward(params, input_ids, attention_mask):
    # embeddings (gathers stay in JAX; their LayerNorm is fused into the kernel)
    # TODO(synk): token_type_ids hard-coded to type 0 for every token.
    emb = (jnp.take(params["word_emb"], input_ids, axis=0)        # [B,S,H]
           + params["pos_emb"][:S][None, :, :]
           + params["type_emb"][0][None, None, :])
    emb = emb.reshape(B * S, H).astype(jnp.float32)

    # block-diagonal additive attention bias, computed ONCE (not per layer/head):
    # bias[i,j] = 0 if query i and key j are in the same example and key j is
    # unmasked, else -1e9.
    seg = jnp.arange(B * S, dtype=jnp.int32) // S
    same = seg[:, None] == seg[None, :]
    key_valid = (attention_mask.reshape(-1) > 0)[None, :]
    attn_bias = jnp.where(same & key_valid, 0.0, NEG_INF).astype(jnp.float32)

    kernel = functools.partial(_bert_fused_kernel, layers=L, batch=B, seq=S,
                               nheads=NH, hdim=HD, eps=LN_EPS)
    vmem = pl.BlockSpec(memory_space=pltpu.MemorySpace.VMEM)

    out = pl.pallas_call(
        kernel,
        out_shape=jax.ShapeDtypeStruct((B, H), jnp.float32),      # lane-dense out
        in_specs=[vmem] * 20,
        out_specs=vmem,
        scratch_shapes=[
            pltpu.VMEM((B * S, H), jnp.bfloat16),                 # ctx scratch
            pltpu.VMEM((B * S, H), jnp.float32),                  # final x (CLS read)
        ],
        compiler_params=pltpu.CompilerParams(
            vmem_limit_bytes=32 * 1024 * 1024),
    )(emb, attn_bias,
      params["emb_ln_g"], params["emb_ln_b"],
      params["wqkv"], params["bqkv"], params["wo"], params["bo"],
      params["ln1_g"], params["ln1_b"],
      params["w1"], params["b1"], params["w2"], params["b2"],
      params["ln2_g"], params["ln2_b"],
      params["pool_w"], params["pool_b"], params["proj_w"], params["proj_b"])
    return out[:, :1]                                             # (B, 1)


# ------------------------------------ main ------------------------------------
if __name__ == "__main__":
    key = jax.random.PRNGKey(0)
    k_param, k_ids = jax.random.split(key)
    params = init_params(k_param)

    input_ids = jax.random.randint(k_ids, (B, S), 0, VOCAB, dtype=jnp.int32)
    attention_mask = jnp.array([[1, 1, 1, 1, 1, 1, 1, 1],
                                [1, 1, 1, 1, 1, 0, 0, 0]], dtype=jnp.int32)

    out = jax.jit(bert_regressor_forward)(params, input_ids, attention_mask)
    out = jax.block_until_ready(out)
    assert out.shape == (B, 1)
    assert bool(jnp.all((out >= 0.0) & (out <= 5.0)))
    print("KERNEL_OK")
</pallas_src>

<mosaic_0001>
module attributes {stable_mosaic.version = 11 : i64} {
  func.func @_bert_fused_kernel(%arg0: memref<16x128xf32, #tpu.memory_space<vmem>>, %arg1: memref<16x16xf32, #tpu.memory_space<vmem>>, %arg2: memref<1x128xf32, #tpu.memory_space<vmem>>, %arg3: memref<1x128xf32, #tpu.memory_space<vmem>>, %arg4: memref<2x128x384xbf16, #tpu.memory_space<vmem>>, %arg5: memref<2x1x384xf32, #tpu.memory_space<vmem>>, %arg6: memref<2x128x128xbf16, #tpu.memory_space<vmem>>, %arg7: memref<2x1x128xf32, #tpu.memory_space<vmem>>, %arg8: memref<2x1x128xf32, #tpu.memory_space<vmem>>, %arg9: memref<2x1x128xf32, #tpu.memory_space<vmem>>, %arg10: memref<2x128x256xbf16, #tpu.memory_space<vmem>>, %arg11: memref<2x1x256xf32, #tpu.memory_space<vmem>>, %arg12: memref<2x256x128xbf16, #tpu.memory_space<vmem>>, %arg13: memref<2x1x128xf32, #tpu.memory_space<vmem>>, %arg14: memref<2x1x128xf32, #tpu.memory_space<vmem>>, %arg15: memref<2x1x128xf32, #tpu.memory_space<vmem>>, %arg16: memref<128x128xbf16, #tpu.memory_space<vmem>>, %arg17: memref<1x128xf32, #tpu.memory_space<vmem>>, %arg18: memref<1x128xf32, #tpu.memory_space<vmem>>, %arg19: memref<1x1xf32, #tpu.memory_space<vmem>>, %arg20: memref<2x128xf32, #tpu.memory_space<vmem>>, %arg21: memref<16x128xbf16, #tpu.memory_space<vmem>>, %arg22: memref<16x128xf32, #tpu.memory_space<vmem>>) attributes {dimension_semantics = [], scalar_prefetch = 0 : i64, scratch_operands = 2 : i64, tpu.core_type = #tpu.core_type<tc>} {
    %c0 = arith.constant 0 : index
    %c0_0 = arith.constant 0 : index
    %0 = vector.load %arg1[%c0, %c0_0] : memref<16x16xf32, #tpu.memory_space<vmem>>, vector<16x16xf32>
    %c0_1 = arith.constant 0 : index
    %c0_2 = arith.constant 0 : index
    %1 = vector.load %arg0[%c0_1, %c0_2] : memref<16x128xf32, #tpu.memory_space<vmem>>, vector<16x128xf32>
    %c0_3 = arith.constant 0 : index
    %c0_4 = arith.constant 0 : index
    %2 = vector.load %arg2[%c0_3, %c0_4] : memref<1x128xf32, #tpu.memory_space<vmem>>, vector<1x128xf32>
    %c0_5 = arith.constant 0 : index
    %c0_6 = arith.constant 0 : index
    %3 = vector.load %arg3[%c0_5, %c0_6] : memref<1x128xf32, #tpu.memory_space<vmem>>, vector<1x128xf32>
    %cst = arith.constant dense<0.000000e+00> : vector<16xf32>
    %4 = vector.multi_reduction <add>, %1, %cst [1] : vector<16x128xf32> to vector<16xf32>
    %5 = vector.shape_cast %4 : vector<16xf32> to vector<16x1xf32>
    %cst_7 = arith.constant 1.280000e+02 : f32
    %6 = vector.broadcast %cst_7 : f32 to vector<16x1xf32>
    %7 = arith.divf %5, %6 : vector<16x1xf32>
    %8 = vector.broadcast %7 : vector<16x1xf32> to vector<16x128xf32>
    %9 = arith.subf %1, %8 : vector<16x128xf32>
    %10 = arith.mulf %9, %9 : vector<16x128xf32>
    %cst_8 = arith.constant dense<0.000000e+00> : vector<16xf32>
    %11 = vector.multi_reduction <add>, %10, %cst_8 [1] : vector<16x128xf32> to vector<16xf32>
    %12 = vector.shape_cast %11 : vector<16xf32> to vector<16x1xf32>
    %cst_9 = arith.constant 1.280000e+02 : f32
    %13 = vector.broadcast %cst_9 : f32 to vector<16x1xf32>
    %14 = arith.divf %12, %13 : vector<16x1xf32>
    %cst_10 = arith.constant 9.99999996E-13 : f32
    %15 = vector.broadcast %cst_10 : f32 to vector<16x1xf32>
    %16 = arith.addf %14, %15 : vector<16x1xf32>
    %17 = math.rsqrt %16 : vector<16x1xf32>
    %18 = vector.broadcast %17 : vector<16x1xf32> to vector<16x128xf32>
    %19 = arith.mulf %9, %18 : vector<16x128xf32>
    %20 = vector.broadcast %2 : vector<1x128xf32> to vector<16x128xf32>
    %21 = arith.mulf %19, %20 : vector<16x128xf32>
    %22 = vector.broadcast %3 : vector<1x128xf32> to vector<16x128xf32>
    %23 = arith.addf %21, %22 : vector<16x128xf32>
    %24 = arith.truncf %23 : vector<16x128xf32> to vector<16x128xbf16>
    %c0_11 = arith.constant 0 : index
    %c0_12 = arith.constant 0 : index
    %c0_13 = arith.constant 0 : index
    %25 = vector.load %arg4[%c0_11, %c0_12, %c0_13] : memref<2x128x384xbf16, #tpu.memory_space<vmem>>, vector<1x128x384xbf16>
    %26 = vector.shape_cast %25 : vector<1x128x384xbf16> to vector<128x384xbf16>
    %cst_14 = arith.constant dense<0.000000e+00> : vector<16x384xf32>
    %27 = tpu.matmul %24, %26, %cst_14 {dimension_numbers = #tpu.dot_dimension_numbers<[1], [0], [0], [1], [0, 0, 1, 1], [], []>} : vector<16x128xbf16>, vector<128x384xbf16>, vector<16x384xf32> -> vector<16x384xf32>
    %c0_15 = arith.constant 0 : index
    %c0_16 = arith.constant 0 : index
    %c0_17 = arith.constant 0 : index
    %28 = vector.load %arg5[%c0_15, %c0_16, %c0_17] : memref<2x1x384xf32, #tpu.memory_space<vmem>>, vector<1x1x384xf32>
    %29 = vector.shape_cast %28 : vector<1x1x384xf32> to vector<1x384xf32>
    %30 = vector.broadcast %29 : vector<1x384xf32> to vector<16x384xf32>
    %31 = arith.addf %27, %30 : vector<16x384xf32>
    %32 = vector.extract_strided_slice %31 {offsets = [0, 0], sizes = [16, 64], strides = [1, 1]} : vector<16x384xf32> to vector<16x64xf32>
    %33 = arith.truncf %32 : vector<16x64xf32> to vector<16x64xbf16>
    %34 = vector.extract_strided_slice %31 {offsets = [0, 128], sizes = [16, 64], strides = [1, 1]} : vector<16x384xf32> to vector<16x64xf32>
    %35 = arith.truncf %34 : vector<16x64xf32> to vector<16x64xbf16>
    %36 = vector.extract_strided_slice %31 {offsets = [0, 256], sizes = [16, 64], strides = [1, 1]} : vector<16x384xf32> to vector<16x64xf32>
    %37 = arith.truncf %36 : vector<16x64xf32> to vector<16x64xbf16>
    %cst_18 = arith.constant dense<0.000000e+00> : vector<16x16xf32>
    %38 = tpu.matmul %33, %35, %cst_18 {dimension_numbers = #tpu.dot_dimension_numbers<[1], [1], [0], [0], [0, 0, 1, 0], [], []>} : vector<16x64xbf16>, vector<16x64xbf16>, vector<16x16xf32> -> vector<16x16xf32>
    %cst_19 = arith.constant 1.250000e-01 : f32
    %39 = vector.broadcast %cst_19 : f32 to vector<16x16xf32>
    %40 = arith.mulf %38, %39 : vector<16x16xf32>
    %41 = arith.addf %40, %0 : vector<16x16xf32>
    %cst_20 = arith.constant dense<0xFF800000> : vector<16xf32>
    %42 = vector.multi_reduction <maximumf>, %41, %cst_20 [1] : vector<16x16xf32> to vector<16xf32>
    %43 = vector.shape_cast %42 : vector<16xf32> to vector<16x1xf32>
    %44 = vector.broadcast %43 : vector<16x1xf32> to vector<16x16xf32>
    %45 = arith.subf %41, %44 : vector<16x16xf32>
    %46 = math.exp %45 : vector<16x16xf32>
    %cst_21 = arith.constant dense<0.000000e+00> : vector<16xf32>
    %47 = vector.multi_reduction <add>, %46, %cst_21 [1] : vector<16x16xf32> to vector<16xf32>
    %48 = vector.shape_cast %47 : vector<16xf32> to vector<16x1xf32>
    %49 = vector.broadcast %48 : vector<16x1xf32> to vector<16x16xf32>
    %50 = arith.divf %46, %49 : vector<16x16xf32>
    %51 = arith.truncf %50 : vector<16x16xf32> to vector<16x16xbf16>
    %cst_22 = arith.constant dense<0.000000e+00> : vector<16x64xf32>
    %52 = tpu.matmul %51, %37, %cst_22 {dimension_numbers = #tpu.dot_dimension_numbers<[1], [0], [0], [1], [0, 0, 1, 1], [], []>} : vector<16x16xbf16>, vector<16x64xbf16>, vector<16x64xf32> -> vector<16x64xf32>
    %53 = arith.truncf %52 : vector<16x64xf32> to vector<16x64xbf16>
    %c0_23 = arith.constant 0 : index
    %c0_24 = arith.constant 0 : index
    %54 = vector.load %arg21[%c0_23, %c0_24] : memref<16x128xbf16, #tpu.memory_space<vmem>>, vector<16x64xbf16>
    tpu.vector_store %arg21[%c0_23, %c0_24], %53 {strides = array<i32>} : memref<16x128xbf16, #tpu.memory_space<vmem>>, vector<16x64xbf16>,
    %55 = vector.extract_strided_slice %31 {offsets = [0, 64], sizes = [16, 64], strides = [1, 1]} : vector<16x384xf32> to vector<16x64xf32>
    %56 = arith.truncf %55 : vector<16x64xf32> to vector<16x64xbf16>
    %57 = vector.extract_strided_slice %31 {offsets = [0, 192], sizes = [16, 64], strides = [1, 1]} : vector<16x384xf32> to vector<16x64xf32>
    %58 = arith.truncf %57 : vector<16x64xf32> to vector<16x64xbf16>
    %59 = vector.extract_strided_slice %31 {offsets = [0, 320], sizes = [16, 64], strides = [1, 1]} : vector<16x384xf32> to vector<16x64xf32>
    %60 = arith.truncf %59 : vector<16x64xf32> to vector<16x64xbf16>
    %cst_25 = arith.constant dense<0.000000e+00> : vector<16x16xf32>
    %61 = tpu.matmul %56, %58, %cst_25 {dimension_numbers = #tpu.dot_dimension_numbers<[1], [1], [0], [0], [0, 0, 1, 0], [], []>} : vector<16x64xbf16>, vector<16x64xbf16>, vector<16x16xf32> -> vector<16x16xf32>
    %cst_26 = arith.constant 1.250000e-01 : f32
    %62 = vector.broadcast %cst_26 : f32 to vector<16x16xf32>
    %63 = arith.mulf %61, %62 : vector<16x16xf32>
    %64 = arith.addf %63, %0 : vector<16x16xf32>
    %cst_27 = arith.constant dense<0xFF800000> : vector<16xf32>
    %65 = vector.multi_reduction <maximumf>, %64, %cst_27 [1] : vector<16x16xf32> to vector<16xf32>
    %66 = vector.shape_cast %65 : vector<16xf32> to vector<16x1xf32>
    %67 = vector.broadcast %66 : vector<16x1xf32> to vector<16x16xf32>
    %68 = arith.subf %64, %67 : vector<16x16xf32>
    %69 = math.exp %68 : vector<16x16xf32>
    %cst_28 = arith.constant dense<0.000000e+00> : vector<16xf32>
    %70 = vector.multi_reduction <add>, %69, %cst_28 [1] : vector<16x16xf32> to vector<16xf32>
    %71 = vector.shape_cast %70 : vector<16xf32> to vector<16x1xf32>
    %72 = vector.broadcast %71 : vector<16x1xf32> to vector<16x16xf32>
    %73 = arith.divf %69, %72 : vector<16x16xf32>
    %74 = arith.truncf %73 : vector<16x16xf32> to vector<16x16xbf16>
    %cst_29 = arith.constant dense<0.000000e+00> : vector<16x64xf32>
    %75 = tpu.matmul %74, %60, %cst_29 {dimension_numbers = #tpu.dot_dimension_numbers<[1], [0], [0], [1], [0, 0, 1, 1], [], []>} : vector<16x16xbf16>, vector<16x64xbf16>, vector<16x64xf32> -> vector<16x64xf32>
    %76 = arith.truncf %75 : vector<16x64xf32> to vector<16x64xbf16>
    %c0_30 = arith.constant 0 : index
    %c64 = arith.constant 64 : index
    %77 = vector.load %arg21[%c0_30, %c64] : memref<16x128xbf16, #tpu.memory_space<vmem>>, vector<16x64xbf16>
    tpu.vector_store %arg21[%c0_30, %c64], %76 {strides = array<i32>} : memref<16x128xbf16, #tpu.memory_space<vmem>>, vector<16x64xbf16>,
    %c0_31 = arith.constant 0 : index
    %c0_32 = arith.constant 0 : index
    %78 = vector.load %arg21[%c0_31, %c0_32] : memref<16x128xbf16, #tpu.memory_space<vmem>>, vector<16x128xbf16>
    %c0_33 = arith.constant 0 : index
    %c0_34 = arith.constant 0 : index
    %c0_35 = arith.constant 0 : index
    %79 = vector.load %arg6[%c0_33, %c0_34, %c0_35] : memref<2x128x128xbf16, #tpu.memory_space<vmem>>, vector<1x128x128xbf16>
    %80 = vector.shape_cast %79 : vector<1x128x128xbf16> to vector<128x128xbf16>
    %cst_36 = arith.constant dense<0.000000e+00> : vector<16x128xf32>
    %81 = tpu.matmul %78, %80, %cst_36 {dimension_numbers = #tpu.dot_dimension_numbers<[1], [0], [0], [1], [0, 0, 1, 1], [], []>} : vector<16x128xbf16>, vector<128x128xbf16>, vector<16x128xf32> -> vector<16x128xf32>
    %c0_37 = arith.constant 0 : index
    %c0_38 = arith.constant 0 : index
    %c0_39 = arith.constant 0 : index
    %82 = vector.load %arg7[%c0_37, %c0_38, %c0_39] : memref<2x1x128xf32, #tpu.memory_space<vmem>>, vector<1x1x128xf32>
    %83 = vector.shape_cast %82 : vector<1x1x128xf32> to vector<1x128xf32>
    %84 = vector.broadcast %83 : vector<1x128xf32> to vector<16x128xf32>
    %85 = arith.addf %81, %84 : vector<16x128xf32>
    %86 = arith.extf %24 : vector<16x128xbf16> to vector<16x128xf32>
    %87 = arith.addf %85, %86 : vector<16x128xf32>
    %c0_40 = arith.constant 0 : index
    %c0_41 = arith.constant 0 : index
    %c0_42 = arith.constant 0 : index
    %88 = vector.load %arg8[%c0_40, %c0_41, %c0_42] : memref<2x1x128xf32, #tpu.memory_space<vmem>>, vector<1x1x128xf32>
    %89 = vector.shape_cast %88 : vector<1x1x128xf32> to vector<1x128xf32>
    %c0_43 = arith.constant 0 : index
    %c0_44 = arith.constant 0 : index
    %c0_45 = arith.constant 0 : index
    %90 = vector.load %arg9[%c0_43, %c0_44, %c0_45] : memref<2x1x128xf32, #tpu.memory_space<vmem>>, vector<1x1x128xf32>
    %91 = vector.shape_cast %90 : vector<1x1x128xf32> to vector<1x128xf32>
    %cst_46 = arith.constant dense<0.000000e+00> : vector<16xf32>
    %92 = vector.multi_reduction <add>, %87, %cst_46 [1] : vector<16x128xf32> to vector<16xf32>
    %93 = vector.shape_cast %92 : vector<16xf32> to vector<16x1xf32>
    %cst_47 = arith.constant 1.280000e+02 : f32
    %94 = vector.broadcast %cst_47 : f32 to vector<16x1xf32>
    %95 = arith.divf %93, %94 : vector<16x1xf32>
    %96 = vector.broadcast %95 : vector<16x1xf32> to vector<16x128xf32>
    %97 = arith.subf %87, %96 : vector<16x128xf32>
    %98 = arith.mulf %97, %97 : vector<16x128xf32>
    %cst_48 = arith.constant dense<0.000000e+00> : vector<16xf32>
    %99 = vector.multi_reduction <add>, %98, %cst_48 [1] : vector<16x128xf32> to vector<16xf32>
    %100 = vector.shape_cast %99 : vector<16xf32> to vector<16x1xf32>
    %cst_49 = arith.constant 1.280000e+02 : f32
    %101 = vector.broadcast %cst_49 : f32 to vector<16x1xf32>
    %102 = arith.divf %100, %101 : vector<16x1xf32>
    %cst_50 = arith.constant 9.99999996E-13 : f32
    %103 = vector.broadcast %cst_50 : f32 to vector<16x1xf32>
    %104 = arith.addf %102, %103 : vector<16x1xf32>
    %105 = math.rsqrt %104 : vector<16x1xf32>
    %106 = vector.broadcast %105 : vector<16x1xf32> to vector<16x128xf32>
    %107 = arith.mulf %97, %106 : vector<16x128xf32>
    %108 = vector.broadcast %89 : vector<1x128xf32> to vector<16x128xf32>
    %109 = arith.mulf %107, %108 : vector<16x128xf32>
    %110 = vector.broadcast %91 : vector<1x128xf32> to vector<16x128xf32>
    %111 = arith.addf %109, %110 : vector<16x128xf32>
    %112 = arith.truncf %111 : vector<16x128xf32> to vector<16x128xbf16>
    %c0_51 = arith.constant 0 : index
    %c0_52 = arith.constant 0 : index
    %c0_53 = arith.constant 0 : index
    %113 = vector.load %arg10[%c0_51, %c0_52, %c0_53] : memref<2x128x256xbf16, #tpu.memory_space<vmem>>, vector<1x128x256xbf16>
    %114 = vector.shape_cast %113 : vector<1x128x256xbf16> to vector<128x256xbf16>
    %cst_54 = arith.constant dense<0.000000e+00> : vector<16x256xf32>
    %115 = tpu.matmul %112, %114, %cst_54 {dimension_numbers = #tpu.dot_dimension_numbers<[1], [0], [0], [1], [0, 0, 1, 1], [], []>} : vector<16x128xbf16>, vector<128x256xbf16>, vector<16x256xf32> -> vector<16x256xf32>
    %c0_55 = arith.constant 0 : index
    %c0_56 = arith.constant 0 : index
    %c0_57 = arith.constant 0 : index
    %116 = vector.load %arg11[%c0_55, %c0_56, %c0_57] : memref<2x1x256xf32, #tpu.memory_space<vmem>>, vector<1x1x256xf32>
    %117 = vector.shape_cast %116 : vector<1x1x256xf32> to vector<1x256xf32>
    %118 = vector.broadcast %117 : vector<1x256xf32> to vector<16x256xf32>
    %119 = arith.addf %115, %118 : vector<16x256xf32>
    %cst_58 = arith.constant 5.000000e-01 : f32
    %120 = vector.broadcast %cst_58 : f32 to vector<16x256xf32>
    %121 = arith.mulf %120, %119 : vector<16x256xf32>
    %cst_59 = arith.constant 4.471500e-02 : f32
    %122 = vector.broadcast %cst_59 : f32 to vector<16x256xf32>
    %123 = arith.mulf %122, %119 : vector<16x256xf32>
    %124 = arith.mulf %123, %119 : vector<16x256xf32>
    %125 = arith.mulf %124, %119 : vector<16x256xf32>
    %126 = arith.addf %119, %125 : vector<16x256xf32>
    %cst_60 = arith.constant 0.797884583 : f32
    %127 = vector.broadcast %cst_60 : f32 to vector<16x256xf32>
    %128 = arith.mulf %127, %126 : vector<16x256xf32>
    %129 = math.tanh %128 : vector<16x256xf32>
    %cst_61 = arith.constant 1.000000e+00 : f32
    %130 = vector.broadcast %cst_61 : f32 to vector<16x256xf32>
    %131 = arith.addf %130, %129 : vector<16x256xf32>
    %132 = arith.mulf %121, %131 : vector<16x256xf32>
    %133 = arith.truncf %132 : vector<16x256xf32> to vector<16x256xbf16>
    %c0_62 = arith.constant 0 : index
    %c0_63 = arith.constant 0 : index
    %c0_64 = arith.constant 0 : index
    %134 = vector.load %arg12[%c0_62, %c0_63, %c0_64] : memref<2x256x128xbf16, #tpu.memory_space<vmem>>, vector<1x256x128xbf16>
    %135 = vector.shape_cast %134 : vector<1x256x128xbf16> to vector<256x128xbf16>
    %cst_65 = arith.constant dense<0.000000e+00> : vector<16x128xf32>
    %136 = tpu.matmul %133, %135, %cst_65 {dimension_numbers = #tpu.dot_dimension_numbers<[1], [0], [0], [1], [0, 0, 1, 1], [], []>} : vector<16x256xbf16>, vector<256x128xbf16>, vector<16x128xf32> -> vector<16x128xf32>
    %c0_66 = arith.constant 0 : index
    %c0_67 = arith.constant 0 : index
    %c0_68 = arith.constant 0 : index
    %137 = vector.load %arg13[%c0_66, %c0_67, %c0_68] : memref<2x1x128xf32, #tpu.memory_space<vmem>>, vector<1x1x128xf32>
    %138 = vector.shape_cast %137 : vector<1x1x128xf32> to vector<1x128xf32>
    %139 = vector.broadcast %138 : vector<1x128xf32> to vector<16x128xf32>
    %140 = arith.addf %136, %139 : vector<16x128xf32>
    %141 = arith.extf %112 : vector<16x128xbf16> to vector<16x128xf32>
    %142 = arith.addf %140, %141 : vector<16x128xf32>
    %c0_69 = arith.constant 0 : index
    %c0_70 = arith.constant 0 : index
    %c0_71 = arith.constant 0 : index
    %143 = vector.load %arg14[%c0_69, %c0_70, %c0_71] : memref<2x1x128xf32, #tpu.memory_space<vmem>>, vector<1x1x128xf32>
    %144 = vector.shape_cast %143 : vector<1x1x128xf32> to vector<1x128xf32>
    %c0_72 = arith.constant 0 : index
    %c0_73 = arith.constant 0 : index
    %c0_74 = arith.constant 0 : index
    %145 = vector.load %arg15[%c0_72, %c0_73, %c0_74] : memref<2x1x128xf32, #tpu.memory_space<vmem>>, vector<1x1x128xf32>
    %146 = vector.shape_cast %145 : vector<1x1x128xf32> to vector<1x128xf32>
    %cst_75 = arith.constant dense<0.000000e+00> : vector<16xf32>
    %147 = vector.multi_reduction <add>, %142, %cst_75 [1] : vector<16x128xf32> to vector<16xf32>
    %148 = vector.shape_cast %147 : vector<16xf32> to vector<16x1xf32>
    %cst_76 = arith.constant 1.280000e+02 : f32
    %149 = vector.broadcast %cst_76 : f32 to vector<16x1xf32>
    %150 = arith.divf %148, %149 : vector<16x1xf32>
    %151 = vector.broadcast %150 : vector<16x1xf32> to vector<16x128xf32>
    %152 = arith.subf %142, %151 : vector<16x128xf32>
    %153 = arith.mulf %152, %152 : vector<16x128xf32>
    %cst_77 = arith.constant dense<0.000000e+00> : vector<16xf32>
    %154 = vector.multi_reduction <add>, %153, %cst_77 [1] : vector<16x128xf32> to vector<16xf32>
    %155 = vector.shape_cast %154 : vector<16xf32> to vector<16x1xf32>
    %cst_78 = arith.constant 1.280000e+02 : f32
    %156 = vector.broadcast %cst_78 : f32 to vector<16x1xf32>
    %157 = arith.divf %155, %156 : vector<16x1xf32>
    %cst_79 = arith.constant 9.99999996E-13 : f32
    %158 = vector.broadcast %cst_79 : f32 to vector<16x1xf32>
    %159 = arith.addf %157, %158 : vector<16x1xf32>
    %160 = math.rsqrt %159 : vector<16x1xf32>
    %161 = vector.broadcast %160 : vector<16x1xf32> to vector<16x128xf32>
    %162 = arith.mulf %152, %161 : vector<16x128xf32>
    %163 = vector.broadcast %144 : vector<1x128xf32> to vector<16x128xf32>
    %164 = arith.mulf %162, %163 : vector<16x128xf32>
    %165 = vector.broadcast %146 : vector<1x128xf32> to vector<16x128xf32>
    %166 = arith.addf %164, %165 : vector<16x128xf32>
    %167 = arith.truncf %166 : vector<16x128xf32> to vector<16x128xbf16>
    %c1 = arith.constant 1 : index
    %c0_80 = arith.constant 0 : index
    %c0_81 = arith.constant 0 : index
    %168 = vector.load %arg4[%c1, %c0_80, %c0_81] : memref<2x128x384xbf16, #tpu.memory_space<vmem>>, vector<1x128x384xbf16>
    %169 = vector.shape_cast %168 : vector<1x128x384xbf16> to vector<128x384xbf16>
    %cst_82 = arith.constant dense<0.000000e+00> : vector<16x384xf32>
    %170 = tpu.matmul %167, %169, %cst_82 {dimension_numbers = #tpu.dot_dimension_numbers<[1], [0], [0], [1], [0, 0, 1, 1], [], []>} : vector<16x128xbf16>, vector<128x384xbf16>, vector<16x384xf32> -> vector<16x384xf32>
    %c1_83 = arith.constant 1 : index
    %c0_84 = arith.constant 0 : index
    %c0_85 = arith.constant 0 : index
    %171 = vector.load %arg5[%c1_83, %c0_84, %c0_85] : memref<2x1x384xf32, #tpu.memory_space<vmem>>, vector<1x1x384xf32>
    %172 = vector.shape_cast %171 : vector<1x1x384xf32> to vector<1x384xf32>
    %173 = vector.broadcast %172 : vector<1x384xf32> to vector<16x384xf32>
    %174 = arith.addf %170, %173 : vector<16x384xf32>
    %175 = vector.extract_strided_slice %174 {offsets = [0, 0], sizes = [16, 64], strides = [1, 1]} : vector<16x384xf32> to vector<16x64xf32>
    %176 = arith.truncf %175 : vector<16x64xf32> to vector<16x64xbf16>
    %177 = vector.extract_strided_slice %174 {offsets = [0, 128], sizes = [16, 64], strides = [1, 1]} : vector<16x384xf32> to vector<16x64xf32>
    %178 = arith.truncf %177 : vector<16x64xf32> to vector<16x64xbf16>
    %179 = vector.extract_strided_slice %174 {offsets = [0, 256], sizes = [16, 64], strides = [1, 1]} : vector<16x384xf32> to vector<16x64xf32>
    %180 = arith.truncf %179 : vector<16x64xf32> to vector<16x64xbf16>
    %cst_86 = arith.constant dense<0.000000e+00> : vector<16x16xf32>
    %181 = tpu.matmul %176, %178, %cst_86 {dimension_numbers = #tpu.dot_dimension_numbers<[1], [1], [0], [0], [0, 0, 1, 0], [], []>} : vector<16x64xbf16>, vector<16x64xbf16>, vector<16x16xf32> -> vector<16x16xf32>
    %cst_87 = arith.constant 1.250000e-01 : f32
    %182 = vector.broadcast %cst_87 : f32 to vector<16x16xf32>
    %183 = arith.mulf %181, %182 : vector<16x16xf32>
    %184 = arith.addf %183, %0 : vector<16x16xf32>
    %cst_88 = arith.constant dense<0xFF800000> : vector<16xf32>
    %185 = vector.multi_reduction <maximumf>, %184, %cst_88 [1] : vector<16x16xf32> to vector<16xf32>
    %186 = vector.shape_cast %185 : vector<16xf32> to vector<16x1xf32>
    %187 = vector.broadcast %186 : vector<16x1xf32> to vector<16x16xf32>
    %188 = arith.subf %184, %187 : vector<16x16xf32>
    %189 = math.exp %188 : vector<16x16xf32>
    %cst_89 = arith.constant dense<0.000000e+00> : vector<16xf32>
    %190 = vector.multi_reduction <add>, %189, %cst_89 [1] : vector<16x16xf32> to vector<16xf32>
    %191 = vector.shape_cast %190 : vector<16xf32> to vector<16x1xf32>
    %192 = vector.broadcast %191 : vector<16x1xf32> to vector<16x16xf32>
    %193 = arith.divf %189, %192 : vector<16x16xf32>
    %194 = arith.truncf %193 : vector<16x16xf32> to vector<16x16xbf16>
    %cst_90 = arith.constant dense<0.000000e+00> : vector<16x64xf32>
    %195 = tpu.matmul %194, %180, %cst_90 {dimension_numbers = #tpu.dot_dimension_numbers<[1], [0], [0], [1], [0, 0, 1, 1], [], []>} : vector<16x16xbf16>, vector<16x64xbf16>, vector<16x64xf32> -> vector<16x64xf32>
    %196 = arith.truncf %195 : vector<16x64xf32> to vector<16x64xbf16>
    %c0_91 = arith.constant 0 : index
    %c0_92 = arith.constant 0 : index
    %197 = vector.load %arg21[%c0_91, %c0_92] : memref<16x128xbf16, #tpu.memory_space<vmem>>, vector<16x64xbf16>
    tpu.vector_store %arg21[%c0_91, %c0_92], %196 {strides = array<i32>} : memref<16x128xbf16, #tpu.memory_space<vmem>>, vector<16x64xbf16>,
    %198 = vector.extract_strided_slice %174 {offsets = [0, 64], sizes = [16, 64], strides = [1, 1]} : vector<16x384xf32> to vector<16x64xf32>
    %199 = arith.truncf %198 : vector<16x64xf32> to vector<16x64xbf16>
    %200 = vector.extract_strided_slice %174 {offsets = [0, 192], sizes = [16, 64], strides = [1, 1]} : vector<16x384xf32> to vector<16x64xf32>
    %201 = arith.truncf %200 : vector<16x64xf32> to vector<16x64xbf16>
    %202 = vector.extract_strided_slice %174 {offsets = [0, 320], sizes = [16, 64], strides = [1, 1]} : vector<16x384xf32> to vector<16x64xf32>
    %203 = arith.truncf %202 : vector<16x64xf32> to vector<16x64xbf16>
    %cst_93 = arith.constant dense<0.000000e+00> : vector<16x16xf32>
    %204 = tpu.matmul %199, %201, %cst_93 {dimension_numbers = #tpu.dot_dimension_numbers<[1], [1], [0], [0], [0, 0, 1, 0], [], []>} : vector<16x64xbf16>, vector<16x64xbf16>, vector<16x16xf32> -> vector<16x16xf32>
    %cst_94 = arith.constant 1.250000e-01 : f32
    %205 = vector.broadcast %cst_94 : f32 to vector<16x16xf32>
    %206 = arith.mulf %204, %205 : vector<16x16xf32>
    %207 = arith.addf %206, %0 : vector<16x16xf32>
    %cst_95 = arith.constant dense<0xFF800000> : vector<16xf32>
    %208 = vector.multi_reduction <maximumf>, %207, %cst_95 [1] : vector<16x16xf32> to vector<16xf32>
    %209 = vector.shape_cast %208 : vector<16xf32> to vector<16x1xf32>
    %210 = vector.broadcast %209 : vector<16x1xf32> to vector<16x16xf32>
    %211 = arith.subf %207, %210 : vector<16x16xf32>
    %212 = math.exp %211 : vector<16x16xf32>
    %cst_96 = arith.constant dense<0.000000e+00> : vector<16xf32>
    %213 = vector.multi_reduction <add>, %212, %cst_96 [1] : vector<16x16xf32> to vector<16xf32>
    %214 = vector.shape_cast %213 : vector<16xf32> to vector<16x1xf32>
    %215 = vector.broadcast %214 : vector<16x1xf32> to vector<16x16xf32>
    %216 = arith.divf %212, %215 : vector<16x16xf32>
    %217 = arith.truncf %216 : vector<16x16xf32> to vector<16x16xbf16>
    %cst_97 = arith.constant dense<0.000000e+00> : vector<16x64xf32>
    %218 = tpu.matmul %217, %203, %cst_97 {dimension_numbers = #tpu.dot_dimension_numbers<[1], [0], [0], [1], [0, 0, 1, 1], [], []>} : vector<16x16xbf16>, vector<16x64xbf16>, vector<16x64xf32> -> vector<16x64xf32>
    %219 = arith.truncf %218 : vector<16x64xf32> to vector<16x64xbf16>
    %c0_98 = arith.constant 0 : index
    %c64_99 = arith.constant 64 : index
    %220 = vector.load %arg21[%c0_98, %c64_99] : memref<16x128xbf16, #tpu.memory_space<vmem>>, vector<16x64xbf16>
    tpu.vector_store %arg21[%c0_98, %c64_99], %219 {strides = array<i32>} : memref<16x128xbf16, #tpu.memory_space<vmem>>, vector<16x64xbf16>,
    %c0_100 = arith.constant 0 : index
    %c0_101 = arith.constant 0 : index
    %221 = vector.load %arg21[%c0_100, %c0_101] : memref<16x128xbf16, #tpu.memory_space<vmem>>, vector<16x128xbf16>
    %c1_102 = arith.constant 1 : index
    %c0_103 = arith.constant 0 : index
    %c0_104 = arith.constant 0 : index
    %222 = vector.load %arg6[%c1_102, %c0_103, %c0_104] : memref<2x128x128xbf16, #tpu.memory_space<vmem>>, vector<1x128x128xbf16>
    %223 = vector.shape_cast %222 : vector<1x128x128xbf16> to vector<128x128xbf16>
    %cst_105 = arith.constant dense<0.000000e+00> : vector<16x128xf32>
    %224 = tpu.matmul %221, %223, %cst_105 {dimension_numbers = #tpu.dot_dimension_numbers<[1], [0], [0], [1], [0, 0, 1, 1], [], []>} : vector<16x128xbf16>, vector<128x128xbf16>, vector<16x128xf32> -> vector<16x128xf32>
    %c1_106 = arith.constant 1 : index
    %c0_107 = arith.constant 0 : index
    %c0_108 = arith.constant 0 : index
    %225 = vector.load %arg7[%c1_106, %c0_107, %c0_108] : memref<2x1x128xf32, #tpu.memory_space<vmem>>, vector<1x1x128xf32>
    %226 = vector.shape_cast %225 : vector<1x1x128xf32> to vector<1x128xf32>
    %227 = vector.broadcast %226 : vector<1x128xf32> to vector<16x128xf32>
    %228 = arith.addf %224, %227 : vector<16x128xf32>
    %229 = arith.extf %167 : vector<16x128xbf16> to vector<16x128xf32>
    %230 = arith.addf %228, %229 : vector<16x128xf32>
    %c1_109 = arith.constant 1 : index
    %c0_110 = arith.constant 0 : index
    %c0_111 = arith.constant 0 : index
    %231 = vector.load %arg8[%c1_109, %c0_110, %c0_111] : memref<2x1x128xf32, #tpu.memory_space<vmem>>, vector<1x1x128xf32>
    %232 = vector.shape_cast %231 : vector<1x1x128xf32> to vector<1x128xf32>
    %c1_112 = arith.constant 1 : index
    %c0_113 = arith.constant 0 : index
    %c0_114 = arith.constant 0 : index
    %233 = vector.load %arg9[%c1_112, %c0_113, %c0_114] : memref<2x1x128xf32, #tpu.memory_space<vmem>>, vector<1x1x128xf32>
    %234 = vector.shape_cast %233 : vector<1x1x128xf32> to vector<1x128xf32>
    %cst_115 = arith.constant dense<0.000000e+00> : vector<16xf32>
    %235 = vector.multi_reduction <add>, %230, %cst_115 [1] : vector<16x128xf32> to vector<16xf32>
    %236 = vector.shape_cast %235 : vector<16xf32> to vector<16x1xf32>
    %cst_116 = arith.constant 1.280000e+02 : f32
    %237 = vector.broadcast %cst_116 : f32 to vector<16x1xf32>
    %238 = arith.divf %236, %237 : vector<16x1xf32>
    %239 = vector.broadcast %238 : vector<16x1xf32> to vector<16x128xf32>
    %240 = arith.subf %230, %239 : vector<16x128xf32>
    %241 = arith.mulf %240, %240 : vector<16x128xf32>
    %cst_117 = arith.constant dense<0.000000e+00> : vector<16xf32>
    %242 = vector.multi_reduction <add>, %241, %cst_117 [1] : vector<16x128xf32> to vector<16xf32>
    %243 = vector.shape_cast %242 : vector<16xf32> to vector<16x1xf32>
    %cst_118 = arith.constant 1.280000e+02 : f32
    %244 = vector.broadcast %cst_118 : f32 to vector<16x1xf32>
    %245 = arith.divf %243, %244 : vector<16x1xf32>
    %cst_119 = arith.constant 9.99999996E-13 : f32
    %246 = vector.broadcast %cst_119 : f32 to vector<16x1xf32>
    %247 = arith.addf %245, %246 : vector<16x1xf32>
    %248 = math.rsqrt %247 : vector<16x1xf32>
    %249 = vector.broadcast %248 : vector<16x1xf32> to vector<16x128xf32>
    %250 = arith.mulf %240, %249 : vector<16x128xf32>
    %251 = vector.broadcast %232 : vector<1x128xf32> to vector<16x128xf32>
    %252 = arith.mulf %250, %251 : vector<16x128xf32>
    %253 = vector.broadcast %234 : vector<1x128xf32> to vector<16x128xf32>
    %254 = arith.addf %252, %253 : vector<16x128xf32>
    %255 = arith.truncf %254 : vector<16x128xf32> to vector<16x128xbf16>
    %c1_120 = arith.constant 1 : index
    %c0_121 = arith.constant 0 : index
    %c0_122 = arith.constant 0 : index
    %256 = vector.load %arg10[%c1_120, %c0_121, %c0_122] : memref<2x128x256xbf16, #tpu.memory_space<vmem>>, vector<1x128x256xbf16>
    %257 = vector.shape_cast %256 : vector<1x128x256xbf16> to vector<128x256xbf16>
    %cst_123 = arith.constant dense<0.000000e+00> : vector<16x256xf32>
    %258 = tpu.matmul %255, %257, %cst_123 {dimension_numbers = #tpu.dot_dimension_numbers<[1], [0], [0], [1], [0, 0, 1, 1], [], []>} : vector<16x128xbf16>, vector<128x256xbf16>, vector<16x256xf32> -> vector<16x256xf32>
    %c1_124 = arith.constant 1 : index
    %c0_125 = arith.constant 0 : index
    %c0_126 = arith.constant 0 : index
    %259 = vector.load %arg11[%c1_124, %c0_125, %c0_126] : memref<2x1x256xf32, #tpu.memory_space<vmem>>, vector<1x1x256xf32>
    %260 = vector.shape_cast %259 : vector<1x1x256xf32> to vector<1x256xf32>
    %261 = vector.broadcast %260 : vector<1x256xf32> to vector<16x256xf32>
    %262 = arith.addf %258, %261 : vector<16x256xf32>
    %cst_127 = arith.constant 5.000000e-01 : f32
    %263 = vector.broadcast %cst_127 : f32 to vector<16x256xf32>
    %264 = arith.mulf %263, %262 : vector<16x256xf32>
    %cst_128 = arith.constant 4.471500e-02 : f32
    %265 = vector.broadcast %cst_128 : f32 to vector<16x256xf32>
    %266 = arith.mulf %265, %262 : vector<16x256xf32>
    %267 = arith.mulf %266, %262 : vector<16x256xf32>
    %268 = arith.mulf %267, %262 : vector<16x256xf32>
    %269 = arith.addf %262, %268 : vector<16x256xf32>
    %cst_129 = arith.constant 0.797884583 : f32
    %270 = vector.broadcast %cst_129 : f32 to vector<16x256xf32>
    %271 = arith.mulf %270, %269 : vector<16x256xf32>
    %272 = math.tanh %271 : vector<16x256xf32>
    %cst_130 = arith.constant 1.000000e+00 : f32
    %273 = vector.broadcast %cst_130 : f32 to vector<16x256xf32>
    %274 = arith.addf %273, %272 : vector<16x256xf32>
    %275 = arith.mulf %264, %274 : vector<16x256xf32>
    %276 = arith.truncf %275 : vector<16x256xf32> to vector<16x256xbf16>
    %c1_131 = arith.constant 1 : index
    %c0_132 = arith.constant 0 : index
    %c0_133 = arith.constant 0 : index
    %277 = vector.load %arg12[%c1_131, %c0_132, %c0_133] : memref<2x256x128xbf16, #tpu.memory_space<vmem>>, vector<1x256x128xbf16>
    %278 = vector.shape_cast %277 : vector<1x256x128xbf16> to vector<256x128xbf16>
    %cst_134 = arith.constant dense<0.000000e+00> : vector<16x128xf32>
    %279 = tpu.matmul %276, %278, %cst_134 {dimension_numbers = #tpu.dot_dimension_numbers<[1], [0], [0], [1], [0, 0, 1, 1], [], []>} : vector<16x256xbf16>, vector<256x128xbf16>, vector<16x128xf32> -> vector<16x128xf32>
    %c1_135 = arith.constant 1 : index
    %c0_136 = arith.constant 0 : index
    %c0_137 = arith.constant 0 : index
    %280 = vector.load %arg13[%c1_135, %c0_136, %c0_137] : memref<2x1x128xf32, #tpu.memory_space<vmem>>, vector<1x1x128xf32>
    %281 = vector.shape_cast %280 : vector<1x1x128xf32> to vector<1x128xf32>
    %282 = vector.broadcast %281 : vector<1x128xf32> to vector<16x128xf32>
    %283 = arith.addf %279, %282 : vector<16x128xf32>
    %284 = arith.extf %255 : vector<16x128xbf16> to vector<16x128xf32>
    %285 = arith.addf %283, %284 : vector<16x128xf32>
    %c1_138 = arith.constant 1 : index
    %c0_139 = arith.constant 0 : index
    %c0_140 = arith.constant 0 : index
    %286 = vector.load %arg14[%c1_138, %c0_139, %c0_140] : memref<2x1x128xf32, #tpu.memory_space<vmem>>, vector<1x1x128xf32>
    %287 = vector.shape_cast %286 : vector<1x1x128xf32> to vector<1x128xf32>
    %c1_141 = arith.constant 1 : index
    %c0_142 = arith.constant 0 : index
    %c0_143 = arith.constant 0 : index
    %288 = vector.load %arg15[%c1_141, %c0_142, %c0_143] : memref<2x1x128xf32, #tpu.memory_space<vmem>>, vector<1x1x128xf32>
    %289 = vector.shape_cast %288 : vector<1x1x128xf32> to vector<1x128xf32>
    %cst_144 = arith.constant dense<0.000000e+00> : vector<16xf32>
    %290 = vector.multi_reduction <add>, %285, %cst_144 [1] : vector<16x128xf32> to vector<16xf32>
    %291 = vector.shape_cast %290 : vector<16xf32> to vector<16x1xf32>
    %cst_145 = arith.constant 1.280000e+02 : f32
    %292 = vector.broadcast %cst_145 : f32 to vector<16x1xf32>
    %293 = arith.divf %291, %292 : vector<16x1xf32>
    %294 = vector.broadcast %293 : vector<16x1xf32> to vector<16x128xf32>
    %295 = arith.subf %285, %294 : vector<16x128xf32>
    %296 = arith.mulf %295, %295 : vector<16x128xf32>
    %cst_146 = arith.constant dense<0.000000e+00> : vector<16xf32>
    %297 = vector.multi_reduction <add>, %296, %cst_146 [1] : vector<16x128xf32> to vector<16xf32>
    %298 = vector.shape_cast %297 : vector<16xf32> to vector<16x1xf32>
    %cst_147 = arith.constant 1.280000e+02 : f32
    %299 = vector.broadcast %cst_147 : f32 to vector<16x1xf32>
    %300 = arith.divf %298, %299 : vector<16x1xf32>
    %cst_148 = arith.constant 9.99999996E-13 : f32
    %301 = vector.broadcast %cst_148 : f32 to vector<16x1xf32>
    %302 = arith.addf %300, %301 : vector<16x1xf32>
    %303 = math.rsqrt %302 : vector<16x1xf32>
    %304 = vector.broadcast %303 : vector<16x1xf32> to vector<16x128xf32>
    %305 = arith.mulf %295, %304 : vector<16x128xf32>
    %306 = vector.broadcast %287 : vector<1x128xf32> to vector<16x128xf32>
    %307 = arith.mulf %305, %306 : vector<16x128xf32>
    %308 = vector.broadcast %289 : vector<1x128xf32> to vector<16x128xf32>
    %309 = arith.addf %307, %308 : vector<16x128xf32>
    %310 = arith.truncf %309 : vector<16x128xf32> to vector<16x128xbf16>
    %311 = arith.extf %310 : vector<16x128xbf16> to vector<16x128xf32>
    %c0_149 = arith.constant 0 : index
    %c0_150 = arith.constant 0 : index
    %312 = vector.load %arg22[%c0_149, %c0_150] : memref<16x128xf32, #tpu.memory_space<vmem>>, vector<16x128xf32>
    tpu.vector_store %arg22[%c0_149, %c0_150], %311 {strides = array<i32>} : memref<16x128xf32, #tpu.memory_space<vmem>>, vector<16x128xf32>,
    %c0_151 = arith.constant 0 : index
    %c0_152 = arith.constant 0 : index
    %313 = tpu.strided_load %arg22[%c0_151, %c0_152] {strides = array<i32: 8, 1>} : memref<16x128xf32, #tpu.memory_space<vmem>>, vector<2x128xf32>
    %314 = arith.truncf %313 : vector<2x128xf32> to vector<2x128xbf16>
    %c0_153 = arith.constant 0 : index
    %c0_154 = arith.constant 0 : index
    %315 = vector.load %arg16[%c0_153, %c0_154] : memref<128x128xbf16, #tpu.memory_space<vmem>>, vector<128x128xbf16>
    %cst_155 = arith.constant dense<0.000000e+00> : vector<2x128xf32>
    %316 = tpu.matmul %314, %315, %cst_155 {dimension_numbers = #tpu.dot_dimension_numbers<[1], [0], [0], [1], [0, 0, 1, 1], [], []>} : vector<2x128xbf16>, vector<128x128xbf16>, vector<2x128xf32> -> vector<2x128xf32>
    %c0_156 = arith.constant 0 : index
    %c0_157 = arith.constant 0 : index
    %317 = vector.load %arg17[%c0_156, %c0_157] : memref<1x128xf32, #tpu.memory_space<vmem>>, vector<1x128xf32>
    %318 = vector.broadcast %317 : vector<1x128xf32> to vector<2x128xf32>
    %319 = arith.addf %316, %318 : vector<2x128xf32>
    %320 = math.tanh %319 : vector<2x128xf32>
    %c0_158 = arith.constant 0 : index
    %c0_159 = arith.constant 0 : index
    %321 = vector.load %arg18[%c0_158, %c0_159] : memref<1x128xf32, #tpu.memory_space<vmem>>, vector<1x128xf32>
    %322 = vector.broadcast %321 : vector<1x128xf32> to vector<2x128xf32>
    %323 = arith.mulf %320, %322 : vector<2x128xf32>
    %cst_160 = arith.constant dense<0.000000e+00> : vector<2xf32>
    %324 = vector.multi_reduction <add>, %323, %cst_160 [1] : vector<2x128xf32> to vector<2xf32>
    %325 = vector.shape_cast %324 : vector<2xf32> to vector<2x1xf32>
    %c0_161 = arith.constant 0 : index
    %c0_162 = arith.constant 0 : index
    %326 = vector.load %arg19[%c0_161, %c0_162] : memref<1x1xf32, #tpu.memory_space<vmem>>, vector<1x1xf32>
    %327 = vector.broadcast %326 : vector<1x1xf32> to vector<2x1xf32>
    %328 = arith.addf %325, %327 : vector<2x1xf32>
    %cst_163 = arith.constant 0.000000e+00 : f32
    %329 = vector.broadcast %cst_163 : f32 to vector<2x1xf32>
    %330 = arith.subf %329, %328 : vector<2x1xf32>
    %331 = math.exp %330 : vector<2x1xf32>
    %cst_164 = arith.constant 1.000000e+00 : f32
    %332 = vector.broadcast %cst_164 : f32 to vector<2x1xf32>
    %333 = arith.addf %332, %331 : vector<2x1xf32>
    %cst_165 = arith.constant 5.000000e+00 : f32
    %334 = vector.broadcast %cst_165 : f32 to vector<2x1xf32>
    %335 = arith.divf %334, %333 : vector<2x1xf32>
    %336 = vector.shape_cast %335 : vector<2x1xf32> to vector<2x1xf32>
    %337 = vector.broadcast %336 : vector<2x1xf32> to vector<2x128xf32>
    %c0_166 = arith.constant 0 : index
    %c0_167 = arith.constant 0 : index
    %338 = vector.load %arg20[%c0_166, %c0_167] : memref<2x128xf32, #tpu.memory_space<vmem>>, vector<2x128xf32>
    tpu.vector_store %arg20[%c0_166, %c0_167], %337 {strides = array<i32>} : memref<2x128xf32, #tpu.memory_space<vmem>>, vector<2x128xf32>,
    return
  }
}

</mosaic_0001>

<llo_original>
// kernel: bert_regressor_forward.1
$region0: #{bert_regressor_forward.1}
  #allocation0 [shape = 'u32[]', space=smem, size = 0x4, offset = 0x4, fixed_abs, tag = 'smem constant byte address 0x4 - core index']
  #allocation1 [shape = 'u32[72,128]{1,0:T(1,128)}', space=vmem, size = 0x9000, scoped, tag = 'internal scratch']
  #allocation2 [shape = 'bf16[16,128]{1,0:T(8,128)(2,1)}', space=vmem, size = 0x1000, scoped, tag = 'scratch operand']
  #allocation3 [shape = 'f32[16,128]{1,0:T(8,128)}', space=vmem, size = 0x2000, scoped, tag = 'scratch operand']
  #allocation4 [shape = 'f32[1,1]{1,0:T(1,128)S(1)}', space=vmem, size = 0x200, scoped, tag = 'scoped memory for bert_regressor_forward.1']
  %s0 = inlined_call_operand.vmem [shape: f32[16,128], index: 0, kind: input, shape index: {}]
  %s1 = inlined_call_operand.vmem [shape: f32[16,16], index: 1, kind: input, shape index: {}]
  %s2 = inlined_call_operand.vmem [shape: f32[1,128], index: 2, kind: input, shape index: {}]
  %s3 = inlined_call_operand.vmem [shape: f32[1,128], index: 3, kind: input, shape index: {}]
  %s4 = inlined_call_operand.hbm [shape: bf16[2,128,384], index: 4, kind: input, shape index: {}]
  %s5 = inlined_call_operand.vmem [shape: f32[2,1,384], index: 5, kind: input, shape index: {}]
  %s6 = inlined_call_operand.vmem [shape: bf16[2,128,128], index: 6, kind: input, shape index: {}]
  %s7 = inlined_call_operand.vmem [shape: f32[2,1,128], index: 7, kind: input, shape index: {}]
  %s8 = inlined_call_operand.vmem [shape: f32[2,1,128], index: 8, kind: input, shape index: {}]
  %s9 = inlined_call_operand.vmem [shape: f32[2,1,128], index: 9, kind: input, shape index: {}]
  %s10 = inlined_call_operand.hbm [shape: bf16[2,128,256], index: 10, kind: input, shape index: {}]
  %s11 = inlined_call_operand.vmem [shape: f32[2,1,256], index: 11, kind: input, shape index: {}]
  %s12 = inlined_call_operand.hbm [shape: bf16[2,256,128], index: 12, kind: input, shape index: {}]
  %s13 = inlined_call_operand.vmem [shape: f32[2,1,128], index: 13, kind: input, shape index: {}]
  %s14 = inlined_call_operand.vmem [shape: f32[2,1,128], index: 14, kind: input, shape index: {}]
  %s15 = inlined_call_operand.vmem [shape: f32[2,1,128], index: 15, kind: input, shape index: {}]
  %s16 = inlined_call_operand.vmem [shape: bf16[128,128], index: 16, kind: input, shape index: {}]
  %s17 = inlined_call_operand.vmem [shape: f32[1,128], index: 17, kind: input, shape index: {}]
  %s18 = inlined_call_operand.vmem [shape: f32[1,128], index: 18, kind: input, shape index: {}]
  %s19 = inlined_call_operand.<no memory space> [shape: f32[1,1], index: 19, kind: input, shape index: {}]
  %s20 = inlined_call_operand.vmem [shape: f32[2,128], index: 20, kind: output, shape index: {}]
  %s21 = sld [smem:[#allocation0]]
  $region102: #{bert_regressor_forward.1} parent=0
    _
  %s23 = ssub.s32 1, %s21
  %s24 = scalar_select 0, %s23, %s21
  %v25 = vstv %s19
  %26 = vst [vmem:[#allocation4] sm:$0x1] %v25
  $region1: #{bert_regressor_forward.1} parent=0
    #allocation5 [shape = 'u8[196608]{0}', space=vmem, size = 0x30000, scoped, tag = 'input window, operand 4, single buffered']
    #allocation6 [shape = 's32[1]{0}', space=sflag, size = 0x4, scoped, tag = 'scoped memory for bert_regressor_forward.1']
    #allocation7 [shape = 'u8[131072]{0}', space=vmem, size = 0x20000, scoped, tag = 'input window, operand 10, single buffered']
    #allocation8 [shape = 's32[1]{0}', space=sflag, size = 0x4, scoped, tag = 'scoped memory for bert_regressor_forward.1']
    #allocation9 [shape = 'u8[131072]{0}', space=vmem, size = 0x20000, scoped, tag = 'input window, operand 12, single buffered']
    %27 = vsyncpa [#allocation6], 0
    %28 = vsyncpa [#allocation8], 0
    // Predicated region
    $region2: #{bert_regressor_forward.1} parent=1 // pred_check
      _
    $region3: #{bert_regressor_forward.1} parent=1 // pred_check_branch
      %30 = sbr.rel (0) target = $region5
    $region4: #{bert_regressor_forward.1} parent=1 // pred_region
      _
    $region5: #{bert_regressor_forward.1} parent=1 // pred_fallthru
      _
    // Predicated region
    $region6: #{bert_regressor_forward.1} parent=1 // pred_check
      _
    $region7: #{bert_regressor_forward.1} parent=1 // pred_check_branch
      %32 = sbr.rel (0) target = $region9
    $region8: #{bert_regressor_forward.1} parent=1 // pred_region
      _
    $region9: #{bert_regressor_forward.1} parent=1 // pred_fallthru
      _
    // Predicated region
    $region10: #{bert_regressor_forward.1} parent=1 // pred_check
      _
    $region11: #{bert_regressor_forward.1} parent=1 // pred_check_branch
      %34 = sbr.rel (0) target = $region13
    $region12: #{bert_regressor_forward.1} parent=1 // pred_region
      _
    $region13: #{bert_regressor_forward.1} parent=1 // pred_fallthru
      _
    // Predicated region
    $region14: #{bert_regressor_forward.1} parent=1 // pred_check
      _
    $region15: #{bert_regressor_forward.1} parent=1 // pred_check_branch
      %36 = sbr.rel (0) target = $region17
    $region16: #{bert_regressor_forward.1} parent=1 // pred_region
      _
    $region17: #{bert_regressor_forward.1} parent=1 // pred_fallthru
      _
    // Predicated region
    $region18: #{bert_regressor_forward.1} parent=1 // pred_check
      _
    $region19: #{bert_regressor_forward.1} parent=1 // pred_check_branch
      %38 = sbr.rel (0) target = $region21
    $region20: #{bert_regressor_forward.1} parent=1 // pred_region
      %40 = vsyncadd [#allocation6], 0
      %s41 = sshll.u32 %s4, 4
      %s42 = int_to_ptr.hbm [resolvable:$true] %s41
      %s43 = sshll.u32 [#allocation5], 4
      %s44 = int_to_ptr.vmem [resolvable:$true] %s43
      %49 = dma.hbm_to_vmem [thread:$0]  %s42, 6144, %s44, [#allocation6], 192, 192, 12
    $region21: #{bert_regressor_forward.1} parent=1 // pred_fallthru
      _
    // Predicated region
    $region22: #{bert_regressor_forward.1} parent=1 // pred_check
      _
    $region23: #{bert_regressor_forward.1} parent=1 // pred_check_branch
      %51 = sbr.rel (0) target = $region25
    $region24: #{bert_regressor_forward.1} parent=1 // pred_region
      _
    $region25: #{bert_regressor_forward.1} parent=1 // pred_fallthru
      _
    // Predicated region
    $region26: #{bert_regressor_forward.1} parent=1 // pred_check
      _
    $region27: #{bert_regressor_forward.1} parent=1 // pred_check_branch
      %53 = sbr.rel (0) target = $region29
    $region28: #{bert_regressor_forward.1} parent=1 // pred_region
      _
    $region29: #{bert_regressor_forward.1} parent=1 // pred_fallthru
      _
    // Predicated region
    $region30: #{bert_regressor_forward.1} parent=1 // pred_check
      _
    $region31: #{bert_regressor_forward.1} parent=1 // pred_check_branch
      %55 = sbr.rel (0) target = $region33
    $region32: #{bert_regressor_forward.1} parent=1 // pred_region
      _
    $region33: #{bert_regressor_forward.1} parent=1 // pred_fallthru
      _
    // Predicated region
    $region34: #{bert_regressor_forward.1} parent=1 // pred_check
      _
    $region35: #{bert_regressor_forward.1} parent=1 // pred_check_branch
      %57 = sbr.rel (0) target = $region37
    $region36: #{bert_regressor_forward.1} parent=1 // pred_region
      _
    $region37: #{bert_regressor_forward.1} parent=1 // pred_fallthru
      _
    // Predicated region
    $region38: #{bert_regressor_forward.1} parent=1 // pred_check
      _
    $region39: #{bert_regressor_forward.1} parent=1 // pred_check_branch
      %59 = sbr.rel (0) target = $region41
    $region40: #{bert_regressor_forward.1} parent=1 // pred_region
      _
    $region41: #{bert_regressor_forward.1} parent=1 // pred_fallthru
      _
    // Predicated region
    $region42: #{bert_regressor_forward.1} parent=1 // pred_check
      _
    $region43: #{bert_regressor_forward.1} parent=1 // pred_check_branch
      %61 = sbr.rel (0) target = $region45
    $region44: #{bert_regressor_forward.1} parent=1 // pred_region
      %63 = vsyncadd [#allocation8], 0
      %s64 = sshll.u32 %s10, 4
      %s65 = int_to_ptr.hbm [resolvable:$true] %s64
      %s66 = sshll.u32 [#allocation7], 4
      %s67 = int_to_ptr.vmem [resolvable:$true] %s66
      %72 = dma.hbm_to_vmem [thread:$0]  %s65, 4096, %s67, [#allocation8], 128, 128, 8
    $region45: #{bert_regressor_forward.1} parent=1 // pred_fallthru
      _
    // Predicated region
    $region46: #{bert_regressor_forward.1} parent=1 // pred_check
      _
    $region47: #{bert_regressor_forward.1} parent=1 // pred_check_branch
      %74 = sbr.rel (0) target = $region49
    $region48: #{bert_regressor_forward.1} parent=1 // pred_region
      _
    $region49: #{bert_regressor_forward.1} parent=1 // pred_fallthru
      _
    // Predicated region
    $region50: #{bert_regressor_forward.1} parent=1 // pred_check
      _
    $region51: #{bert_regressor_forward.1} parent=1 // pred_check_branch
      %76 = sbr.rel (0) target = $region53
    $region52: #{bert_regressor_forward.1} parent=1 // pred_region
      %78 = vsyncadd [#allocation8], 0
      %s79 = sshll.u32 %s12, 4
      %s80 = int_to_ptr.hbm [resolvable:$true] %s79
      %s81 = sshll.u32 [#allocation9], 4
      %s82 = int_to_ptr.vmem [resolvable:$true] %s81
      %87 = dma.hbm_to_vmem [thread:$0]  %s80, 4096, %s82, [#allocation8], 64, 64, 4
    $region53: #{bert_regressor_forward.1} parent=1 // pred_fallthru
      _
    // Predicated region
    $region54: #{bert_regressor_forward.1} parent=1 // pred_check
      _
    $region55: #{bert_regressor_forward.1} parent=1 // pred_check_branch
      %89 = sbr.rel (0) target = $region57
    $region56: #{bert_regressor_forward.1} parent=1 // pred_region
      _
    $region57: #{bert_regressor_forward.1} parent=1 // pred_fallthru
      _
    // Predicated region
    $region58: #{bert_regressor_forward.1} parent=1 // pred_check
      _
    $region59: #{bert_regressor_forward.1} parent=1 // pred_check_branch
      %91 = sbr.rel (0) target = $region61
    $region60: #{bert_regressor_forward.1} parent=1 // pred_region
      _
    $region61: #{bert_regressor_forward.1} parent=1 // pred_fallthru
      _
    // Predicated region
    $region62: #{bert_regressor_forward.1} parent=1 // pred_check
      _
    $region63: #{bert_regressor_forward.1} parent=1 // pred_check_branch
      %93 = sbr.rel (0) target = $region65
    $region64: #{bert_regressor_forward.1} parent=1 // pred_region
      _
    $region65: #{bert_regressor_forward.1} parent=1 // pred_fallthru
      _
    // Predicated region
    $region66: #{bert_regressor_forward.1} parent=1 // pred_check
      _
    $region67: #{bert_regressor_forward.1} parent=1 // pred_check_branch
      %95 = sbr.rel (0) target = $region69
    $region68: #{bert_regressor_forward.1} parent=1 // pred_region
      _
    $region69: #{bert_regressor_forward.1} parent=1 // pred_fallthru
      _
    // Predicated region
    $region70: #{bert_regressor_forward.1} parent=1 // pred_check
      _
    $region71: #{bert_regressor_forward.1} parent=1 // pred_check_branch
      %97 = sbr.rel (0) target = $region73
    $region72: #{bert_regressor_forward.1} parent=1 // pred_region
      _
    $region73: #{bert_regressor_forward.1} parent=1 // pred_fallthru
      _
    // Predicated region
    $region74: #{bert_regressor_forward.1} parent=1 // pred_check
      _
    $region75: #{bert_regressor_forward.1} parent=1 // pred_check_branch
      %99 = sbr.rel (0) target = $region77
    $region76: #{bert_regressor_forward.1} parent=1 // pred_region
      _
    $region77: #{bert_regressor_forward.1} parent=1 // pred_fallthru
      _
    // Predicated region
    $region78: #{bert_regressor_forward.1} parent=1 // pred_check
      _
    $region79: #{bert_regressor_forward.1} parent=1 // pred_check_branch
      %101 = sbr.rel (0) target = $region81
    $region80: #{bert_regressor_forward.1} parent=1 // pred_region
      _
    $region81: #{bert_regressor_forward.1} parent=1 // pred_fallthru
      _
    // Predicated region
    $region82: #{bert_regressor_forward.1} parent=1 // pred_check
      _
    $region83: #{bert_regressor_forward.1} parent=1 // pred_check_branch
      %103 = sbr.rel (0) target = $region85
    $region84: #{bert_regressor_forward.1} parent=1 // pred_region
      %105 = dma.done [#allocation6], 6144
    $region85: #{bert_regressor_forward.1} parent=1 // pred_fallthru
      _
    // Predicated region
    $region86: #{bert_regressor_forward.1} parent=1 // pred_check
      _
    $region87: #{bert_regressor_forward.1} parent=1 // pred_check_branch
      %107 = sbr.rel (0) target = $region89
    $region88: #{bert_regressor_forward.1} parent=1 // pred_region
      %109 = dma.done [#allocation8], 4096
    $region89: #{bert_regressor_forward.1} parent=1 // pred_fallthru
      _
    // Predicated region
    $region90: #{bert_regressor_forward.1} parent=1 // pred_check
      _
    $region91: #{bert_regressor_forward.1} parent=1 // pred_check_branch
      %111 = sbr.rel (0) target = $region93
    $region92: #{bert_regressor_forward.1} parent=1 // pred_region
      %113 = dma.done [#allocation8], 4096
    $region93: #{bert_regressor_forward.1} parent=1 // pred_fallthru
      _
    %v115 = vld [vmem:[%s1] sm:$0xff]
    %v116 = vld [vmem:[%s1 + $0x8] sm:$0xff]
    %v117 = vld [vmem:[%s0] sm:$0xff]
    %v118 = vld [vmem:[%s0 + $0x8] sm:$0xff]
    %v119 = vld [vmem:[%s2] sm:$0x1]
    %v120 = vld [vmem:[%s3] sm:$0x1]
    %121 = vadd.xlane.f32.xlu0 %v117
    %v122 = vpop.xlane.xlu0 %121
    %123 = vadd.xlane.f32.xlu0 %v118
    %v124 = vpop.xlane.xlu0 %123
    %v125 = vrcp.pop 128.0
    %v126 = vmul.f32 128.0, %v125
    %v127 = vsub.f32 1.0, %v126
    %v128 = vmul.f32 %v125, %v127
    %v129 = vadd.f32 %v125, %v128
    %vm130 = vweird.f32 %v125
    %v131 = vsel %vm130, %v125, %v129
    %v132 = vmul.f32 %v122, %v131
    %v133 = vmul.f32 %v124, %v131
    %v134 = vsub.f32 %v117, %v132
    %v135 = vsub.f32 %v118, %v133
    %v136 = vmul.f32 %v134, %v134
    %v137 = vmul.f32 %v135, %v135
    %138 = vadd.xlane.f32.xlu0 %v136
    %v139 = vpop.xlane.xlu0 %138
    %140 = vadd.xlane.f32.xlu0 %v137
    %v141 = vpop.xlane.xlu0 %140
    %v142 = vmul.f32 %v139, %v131
    %v143 = vmul.f32 %v141, %v131
    %v144 = vadd.f32 %v142, 1e-12
    %v145 = vadd.f32 %v143, 1e-12
    %v146 = vrsqrt.pop %v144
    %v147 = vmul.f32 %v146, %v144
    %v148 = vmul.f32 %v147, %v146
    %v149 = vmul.f32 0.5, %v148
    %v150 = vsub.f32 1.5, %v149
    %v151 = vmul.f32 %v146, %v150
    %vm152 = vweird.f32 %v144
    %vm153 = vweird.f32 %v146
    %vm154 = vmor %vm152, %vm153
    %v155 = vsel %vm154, %v146, %v151
    %v156 = vrsqrt.pop %v145
    %v157 = vmul.f32 %v156, %v145
    %v158 = vmul.f32 %v157, %v156
    %v159 = vmul.f32 0.5, %v158
    %v160 = vsub.f32 1.5, %v159
    %v161 = vmul.f32 %v156, %v160
    %vm162 = vweird.f32 %v145
    %vm163 = vweird.f32 %v156
    %vm164 = vmor %vm162, %vm163
    %v165 = vsel %vm164, %v156, %v161
    %v166 = vmul.f32 %v134, %v155
    %v167 = vmul.f32 %v135, %v165
    %v169 = vperm.slane %v119, 0
    %v171 = vmul.f32 %v166, %v169
    %v172 = vmul.f32 %v167, %v169
    %v174 = vperm.slane %v120, 0
    %v176 = vadd.f32 %v171, %v174
    %v177 = vadd.f32 %v172, %v174
    %v178 = vpack.c.bf16 %v176, %v176
    %v179 = vpack.c.bf16 %v177, %v177
    %v180 = vld [vmem:[#allocation5] sm:$0xff]
    %v181 = vld [vmem:[#allocation5 + $0x8] sm:$0xf]
    %v182 = vld [vmem:[#allocation5 + $0xc] sm:$0xff]
    %v183 = vld [vmem:[#allocation5 + $0x14] sm:$0xf]
    %v184 = vld [vmem:[#allocation5 + $0x18] sm:$0xff]
    %v185 = vld [vmem:[#allocation5 + $0x20] sm:$0xf]
    %v186 = vld [vmem:[#allocation5 + $0x24] sm:$0xff]
    %v187 = vld [vmem:[#allocation5 + $0x2c] sm:$0xf]
    %v188 = vld [vmem:[#allocation5 + $0x30] sm:$0xff]
    %v189 = vld [vmem:[#allocation5 + $0x38] sm:$0xf]
    %v190 = vld [vmem:[#allocation5 + $0x3c] sm:$0xff]
    %v191 = vld [vmem:[#allocation5 + $0x44] sm:$0xf]
    %v192 = vld [vmem:[#allocation5 + $0x48] sm:$0xff]
    %v193 = vld [vmem:[#allocation5 + $0x50] sm:$0xf]
    %v194 = vld [vmem:[#allocation5 + $0x54] sm:$0xff]
    %v195 = vld [vmem:[#allocation5 + $0x5c] sm:$0xf]
    %v196 = vld [vmem:[#allocation5 + $0x60] sm:$0xff]
    %v197 = vld [vmem:[#allocation5 + $0x68] sm:$0xf]
    %v198 = vld [vmem:[#allocation5 + $0x6c] sm:$0xff]
    %v199 = vld [vmem:[#allocation5 + $0x74] sm:$0xf]
    %v200 = vld [vmem:[#allocation5 + $0x78] sm:$0xff]
    %v201 = vld [vmem:[#allocation5 + $0x80] sm:$0xf]
    %v202 = vld [vmem:[#allocation5 + $0x84] sm:$0xff]
    %v203 = vld [vmem:[#allocation5 + $0x8c] sm:$0xf]
    %v204 = vld [vmem:[#allocation5 + $0x90] sm:$0xff]
    %v205 = vld [vmem:[#allocation5 + $0x98] sm:$0xf]
    %v206 = vld [vmem:[#allocation5 + $0x9c] sm:$0xff]
    %v207 = vld [vmem:[#allocation5 + $0xa4] sm:$0xf]
    %v208 = vld [vmem:[#allocation5 + $0xa8] sm:$0xff]
    %v209 = vld [vmem:[#allocation5 + $0xb0] sm:$0xf]
    %v210 = vld [vmem:[#allocation5 + $0xb4] sm:$0xff]
    %v211 = vld [vmem:[#allocation5 + $0xbc] sm:$0xf]
    %v212 = vld [vmem:[%s5] sm:$0x7]
    %v214 = vperm.slane %v212, 0
    %v215 = vperm.slane %v212, 1
    %v216 = vperm.slane %v212, 2
    %v222 = vunpack.c.l.b16 %v178
    %v223 = vunpack.c.l.b16 %v179
    %v224 = vpack.c.b16 %v223, %v222
    %v258 = vunpack.c.l.b16 %v180
    %v259 = vunpack.c.h.b16 %v180
    %v260 = vunpack.c.l.b16 %v181
    %v261 = vunpack.c.l.b16 %v182
    %v262 = vunpack.c.h.b16 %v182
    %v263 = vunpack.c.l.b16 %v183
    %v264 = vunpack.c.l.b16 %v184
    %v265 = vunpack.c.h.b16 %v184
    %v266 = vunpack.c.l.b16 %v185
    %v267 = vunpack.c.l.b16 %v186
    %v268 = vunpack.c.h.b16 %v186
    %v269 = vunpack.c.l.b16 %v187
    %v270 = vunpack.c.l.b16 %v188
    %v271 = vunpack.c.h.b16 %v188
    %v272 = vunpack.c.l.b16 %v189
    %v273 = vunpack.c.l.b16 %v190
    %v274 = vunpack.c.h.b16 %v190
    %v275 = vunpack.c.l.b16 %v191
    %v276 = vunpack.c.l.b16 %v192
    %v277 = vunpack.c.h.b16 %v192
    %v278 = vunpack.c.l.b16 %v193
    %v279 = vunpack.c.l.b16 %v194
    %v280 = vunpack.c.h.b16 %v194
    %v281 = vunpack.c.l.b16 %v195
    %v282 = vunpack.c.l.b16 %v196
    %v283 = vunpack.c.h.b16 %v196
    %v284 = vunpack.c.l.b16 %v197
    %v285 = vunpack.c.l.b16 %v198
    %v286 = vunpack.c.h.b16 %v198
    %v287 = vunpack.c.l.b16 %v199
    %v288 = vunpack.c.l.b16 %v200
    %v289 = vunpack.c.h.b16 %v200
    %v290 = vunpack.c.l.b16 %v201
    %v291 = vunpack.c.l.b16 %v202
    %v292 = vunpack.c.h.b16 %v202
    %v293 = vunpack.c.l.b16 %v203
    %v294 = vunpack.c.l.b16 %v204
    %v295 = vunpack.c.h.b16 %v204
    %v296 = vunpack.c.l.b16 %v205
    %v297 = vunpack.c.l.b16 %v206
    %v298 = vunpack.c.h.b16 %v206
    %v299 = vunpack.c.l.b16 %v207
    %v300 = vunpack.c.l.b16 %v208
    %v301 = vunpack.c.h.b16 %v208
    %v302 = vunpack.c.l.b16 %v209
    %v303 = vunpack.c.l.b16 %v210
    %v304 = vunpack.c.h.b16 %v210
    %v305 = vunpack.c.l.b16 %v211
    %v306 = vpack.c.b16 %v261, %v258
    %v307 = vpack.c.b16 %v262, %v259
    %v308 = vpack.c.b16 %v263, %v260
    %v309 = vpack.c.b16 %v267, %v264
    %v310 = vpack.c.b16 %v268, %v265
    %v311 = vpack.c.b16 %v269, %v266
    %v312 = vpack.c.b16 %v273, %v270
    %v313 = vpack.c.b16 %v274, %v271
    %v314 = vpack.c.b16 %v275, %v272
    %v315 = vpack.c.b16 %v279, %v276
    %v316 = vpack.c.b16 %v280, %v277
    %v317 = vpack.c.b16 %v281, %v278
    %v318 = vpack.c.b16 %v285, %v282
    %v319 = vpack.c.b16 %v286, %v283
    %v320 = vpack.c.b16 %v287, %v284
    %v321 = vpack.c.b16 %v291, %v288
    %v322 = vpack.c.b16 %v292, %v289
    %v323 = vpack.c.b16 %v293, %v290
    %v324 = vpack.c.b16 %v297, %v294
    %v325 = vpack.c.b16 %v298, %v295
    %v326 = vpack.c.b16 %v299, %v296
    %v327 = vpack.c.b16 %v303, %v300
    %v328 = vpack.c.b16 %v304, %v301
    %v329 = vpack.c.b16 %v305, %v302
    %354 = vmatpush.bf16.msra.mxu0 %v327
    %355 = vmatpush.bf16.msra.mxu0 %v324
    %356 = vmatpush.bf16.msra.mxu0 %v321
    %357 = vmatpush.bf16.msra.mxu0 %v318
    %358 = vmatpush.bf16.msra.mxu0 %v315
    %359 = vmatpush.bf16.msra.mxu0 %v312
    %360 = vmatpush.bf16.msra.mxu0 %v309
    %361 = vmatpush.bf16.msra.mxu0 %v306
    %362 = vmatmul.bf16.gmra.mxu0 %v224
    %v363 = vpop.f32.mrf.mxu0
    %v364 = vadd.f32 %v214, %v363
    %v365 = vpop.f32.mrf.mxu0
    %v366 = vadd.f32 %v214, %v365
    %367 = vdwg.mxu0
    %368 = vmatpush.bf16.msra.mxu0 %v328
    %369 = vmatpush.bf16.msra.mxu0 %v325
    %370 = vmatpush.bf16.msra.mxu0 %v322
    %371 = vmatpush.bf16.msra.mxu0 %v319
    %372 = vmatpush.bf16.msra.mxu0 %v316
    %373 = vmatpush.bf16.msra.mxu0 %v313
    %374 = vmatpush.bf16.msra.mxu0 %v310
    %375 = vmatpush.bf16.msra.mxu0 %v307
    %376 = vmatmul.bf16.gmra.mxu0 %v224
    %v377 = vpop.f32.mrf.mxu0
    %v378 = vadd.f32 %v215, %v377
    %v379 = vpop.f32.mrf.mxu0
    %v380 = vadd.f32 %v215, %v379
    %381 = vdwg.mxu0
    %382 = vmatpush.bf16.msra.mxu0 %v329
    %383 = vmatpush.bf16.msra.mxu0 %v326
    %384 = vmatpush.bf16.msra.mxu0 %v323
    %385 = vmatpush.bf16.msra.mxu0 %v320
    %386 = vmatpush.bf16.msra.mxu0 %v317
    %387 = vmatpush.bf16.msra.mxu0 %v314
    %388 = vmatpush.bf16.msra.mxu0 %v311
    %389 = vmatpush.bf16.msra.mxu0 %v308
    %390 = vmatmul.bf16.gmra.mxu0 %v224
    %v391 = vpop.f32.mrf.mxu0
    %v392 = vadd.f32 %v216, %v391
    %v393 = vpop.f32.mrf.mxu0
    %v394 = vadd.f32 %v216, %v393
    %395 = vdwg.mxu0
    %v396 = vpack.c.bf16 %v366, %v364
    %v397 = vpack.c.bf16 %v380, %v378
    %v398 = vpack.c.bf16 %v394, %v392
    %vm399 = vcmask 523264
    %v401 = vsel %vm399, %v396, 0
    %v404 = vsel %vm399, %v397, 0
    %406 = vmatpush.bf16.xpose.msra.mxu0 0
    %407 = vmatpush.bf16.xpose.msra.mxu0 0
    %408 = vmatpush.bf16.xpose.msra.mxu0 0
    %409 = vmatpush.bf16.xpose.msra.mxu0 0
    %410 = vmatpush.bf16.xpose.msra.mxu0 0
    %411 = vmatpush.bf16.xpose.msra.mxu0 0
    %412 = vmatpush.bf16.xpose.msra.mxu0 0
    %413 = vmatpush.bf16.xpose.msra.mxu0 %v404
    %414 = vmatmul.bf16.gmra.mxu0 %v401
    %v415 = vpop.f32.mrf.mxu0
    %v416 = vadd.f32 0.0, %v415
    %v417 = vpop.f32.mrf.mxu0
    %v418 = vadd.f32 0.0, %v417
    %419 = vdwg.mxu0
    %v420 = vmul.f32 %v416, 0.125
    %v421 = vmul.f32 %v418, 0.125
    %v422 = vadd.f32 %v420, %v115
    %v423 = vadd.f32 %v421, %v116
    %vm424 = vcmask 130048
    %v425 = vsel %vm424, %v422, -inf
    %426 = vmax.xlane.f32.xlu0 %v425
    %v427 = vpop.xlane.xlu0 %426
    %v428 = vsel %vm424, %v423, -inf
    %429 = vmax.xlane.f32.xlu0 %v428
    %v430 = vpop.xlane.xlu0 %429
    %v431 = vsub.f32 %v422, %v427
    %v432 = vsub.f32 %v423, %v430
    %v433 = vmul.f32 %v431, 1.442695
    %v434 = vpow.pop %v433
    %v435 = vmul.f32 %v432, 1.442695
    %v436 = vpow.pop %v435
    %v437 = vsel %vm424, %v434, 0.0
    %438 = vadd.xlane.f32.xlu0 %v437
    %v439 = vpop.xlane.xlu0 %438
    %v440 = vsel %vm424, %v436, 0.0
    %441 = vadd.xlane.f32.xlu0 %v440
    %v442 = vpop.xlane.xlu0 %441
    %v443 = vrcp.pop %v439
    %v444 = vmul.f32 %v439, %v443
    %v445 = vsub.f32 1.0, %v444
    %v446 = vmul.f32 %v443, %v445
    %v447 = vadd.f32 %v443, %v446
    %vm448 = vweird.f32 %v439
    %vm449 = vweird.f32 %v443
    %vm450 = vmor %vm448, %vm449
    %v451 = vsel %vm450, %v443, %v447
    %v452 = vand.u32 2147483647, %v439
    %vm453 = vcmp.eq.f32.partialorder %v452, 8.507059e+37
    %v454 = vand.u32 %v439, 2147483648
    %v455 = vor.u32 1.1754944e-38, %v454
    %v456 = vsel %vm453, %v455, %v451
    %v457 = vmul.f32 %v434, %v456
    %v458 = vrcp.pop %v442
    %v459 = vmul.f32 %v442, %v458
    %v460 = vsub.f32 1.0, %v459
    %v461 = vmul.f32 %v458, %v460
    %v462 = vadd.f32 %v458, %v461
    %vm463 = vweird.f32 %v442
    %vm464 = vweird.f32 %v458
    %vm465 = vmor %vm463, %vm464
    %v466 = vsel %vm465, %v458, %v462
    %v467 = vand.u32 2147483647, %v442
    %vm468 = vcmp.eq.f32.partialorder %v467, 8.507059e+37
    %v469 = vand.u32 %v442, 2147483648
    %v470 = vor.u32 1.1754944e-38, %v469
    %v471 = vsel %vm468, %v470, %v466
    %v472 = vmul.f32 %v436, %v471
    %v473 = vpack.c.bf16 %v472, %v457
    %v475 = vsel %vm424, %v473, 0
    %477 = vmatpush.bf16.msra.mxu0 0
    %478 = vmatpush.bf16.msra.mxu0 0
    %479 = vmatpush.bf16.msra.mxu0 0
    %480 = vmatpush.bf16.msra.mxu0 0
    %481 = vmatpush.bf16.msra.mxu0 0
    %482 = vmatpush.bf16.msra.mxu0 0
    %483 = vmatpush.bf16.msra.mxu0 0
    %484 = vmatpush.bf16.msra.mxu0 %v398
    %485 = vmatmul.bf16.gmra.mxu0 %v475
    %v486 = vpop.f32.mrf.mxu0
    %v487 = vadd.f32 0.0, %v486
    %v488 = vpop.f32.mrf.mxu0
    %v489 = vadd.f32 0.0, %v488
    %490 = vdwg.mxu0
    %v491 = vpack.c.bf16 %v487, %v487
    %v492 = vpack.c.bf16 %v489, %v489
    %vm493 = vcmask 519168
    %494 = vst.msk [vmem:[#allocation2] sm:$0xf] %vm493, %v491
    %495 = vst.msk [vmem:[#allocation2 + $0x4] sm:$0xf] %vm493, %v492
    %497 = vrot.lane.b32.xlu0 %v396, 64
    %v498 = vpop.permute.xlu0 %497
    %500 = vrot.lane.b32.xlu0 %v397, 64
    %v501 = vpop.permute.xlu0 %500
    %v503 = vsel %vm399, %v498, 0
    %v506 = vsel %vm399, %v501, 0
    %508 = vmatpush.bf16.xpose.msra.mxu0 0
    %509 = vmatpush.bf16.xpose.msra.mxu0 0
    %510 = vmatpush.bf16.xpose.msra.mxu0 0
    %511 = vmatpush.bf16.xpose.msra.mxu0 0
    %512 = vmatpush.bf16.xpose.msra.mxu0 0
    %513 = vmatpush.bf16.xpose.msra.mxu0 0
    %514 = vmatpush.bf16.xpose.msra.mxu0 0
    %515 = vmatpush.bf16.xpose.msra.mxu0 %v506
    %516 = vmatmul.bf16.gmra.mxu0 %v503
    %v517 = vpop.f32.mrf.mxu0
    %v518 = vadd.f32 0.0, %v517
    %v519 = vpop.f32.mrf.mxu0
    %v520 = vadd.f32 0.0, %v519
    %521 = vdwg.mxu0
    %v522 = vmul.f32 %v518, 0.125
    %v523 = vmul.f32 %v520, 0.125
    %v524 = vadd.f32 %v522, %v115
    %v525 = vadd.f32 %v523, %v116
    %v526 = vsel %vm424, %v524, -inf
    %527 = vmax.xlane.f32.xlu0 %v526
    %v528 = vpop.xlane.xlu0 %527
    %v529 = vsel %vm424, %v525, -inf
    %530 = vmax.xlane.f32.xlu0 %v529
    %v531 = vpop.xlane.xlu0 %530
    %v532 = vsub.f32 %v524, %v528
    %v533 = vsub.f32 %v525, %v531
    %v534 = vmul.f32 %v532, 1.442695
    %v535 = vpow.pop %v534
    %v536 = vmul.f32 %v533, 1.442695
    %v537 = vpow.pop %v536
    %v538 = vsel %vm424, %v535, 0.0
    %539 = vadd.xlane.f32.xlu0 %v538
    %v540 = vpop.xlane.xlu0 %539
    %v541 = vsel %vm424, %v537, 0.0
    %542 = vadd.xlane.f32.xlu0 %v541
    %v543 = vpop.xlane.xlu0 %542
    %v544 = vrcp.pop %v540
    %v545 = vmul.f32 %v540, %v544
    %v546 = vsub.f32 1.0, %v545
    %v547 = vmul.f32 %v544, %v546
    %v548 = vadd.f32 %v544, %v547
    %vm549 = vweird.f32 %v540
    %vm550 = vweird.f32 %v544
    %vm551 = vmor %vm549, %vm550
    %v552 = vsel %vm551, %v544, %v548
    %v553 = vand.u32 2147483647, %v540
    %vm554 = vcmp.eq.f32.partialorder %v553, 8.507059e+37
    %v555 = vand.u32 %v540, 2147483648
    %v556 = vor.u32 1.1754944e-38, %v555
    %v557 = vsel %vm554, %v556, %v552
    %v558 = vmul.f32 %v535, %v557
    %v559 = vrcp.pop %v543
    %v560 = vmul.f32 %v543, %v559
    %v561 = vsub.f32 1.0, %v560
    %v562 = vmul.f32 %v559, %v561
    %v563 = vadd.f32 %v559, %v562
    %vm564 = vweird.f32 %v543
    %vm565 = vweird.f32 %v559
    %vm566 = vmor %vm564, %vm565
    %v567 = vsel %vm566, %v559, %v563
    %v568 = vand.u32 2147483647, %v543
    %vm569 = vcmp.eq.f32.partialorder %v568, 8.507059e+37
    %v570 = vand.u32 %v543, 2147483648
    %v571 = vor.u32 1.1754944e-38, %v570
    %v572 = vsel %vm569, %v571, %v567
    %v573 = vmul.f32 %v537, %v572
    %v574 = vpack.c.bf16 %v573, %v558
    %576 = vrot.lane.b32.xlu0 %v398, 64
    %v577 = vpop.permute.xlu0 %576
    %v580 = vsel %vm424, %v574, 0
    %582 = vmatpush.bf16.msra.mxu0 0
    %583 = vmatpush.bf16.msra.mxu0 0
    %584 = vmatpush.bf16.msra.mxu0 0
    %585 = vmatpush.bf16.msra.mxu0 0
    %586 = vmatpush.bf16.msra.mxu0 0
    %587 = vmatpush.bf16.msra.mxu0 0
    %588 = vmatpush.bf16.msra.mxu0 0
    %589 = vmatpush.bf16.msra.mxu0 %v577
    %590 = vmatmul.bf16.gmra.mxu0 %v580
    %v591 = vpop.f32.mrf.mxu0
    %v592 = vadd.f32 0.0, %v591
    %v593 = vpop.f32.mrf.mxu0
    %v594 = vadd.f32 0.0, %v593
    %595 = vdwg.mxu0
    %v596 = vpack.c.bf16 %v592, %v592
    %v597 = vpack.c.bf16 %v594, %v594
    %600 = vrot.lane.b32.xlu0 %v596, 64
    %v601 = vpop.permute.xlu0 %600
    %602 = vrot.lane.b32.xlu0 %v597, 64
    %v603 = vpop.permute.xlu0 %602
    %vm606 = vcmask 1043968
    %607 = vst.msk [vmem:[#allocation2] sm:$0xf] %vm606, %v601
    %608 = vst.msk [vmem:[#allocation2 + $0x4] sm:$0xf] %vm606, %v603
    %v609 = vld [vmem:[#allocation2] sm:$0xf]
    %v610 = vld [vmem:[#allocation2 + $0x4] sm:$0xf]
    %v611 = vld [vmem:[%s6] sm:$0xf]
    %v612 = vld [vmem:[%s6 + $0x4] sm:$0xf]
    %v613 = vld [vmem:[%s6 + $0x8] sm:$0xf]
    %v614 = vld [vmem:[%s6 + $0xc] sm:$0xf]
    %v615 = vld [vmem:[%s6 + $0x10] sm:$0xf]
    %v616 = vld [vmem:[%s6 + $0x14] sm:$0xf]
    %v617 = vld [vmem:[%s6 + $0x18] sm:$0xf]
    %v618 = vld [vmem:[%s6 + $0x1c] sm:$0xf]
    %v619 = vld [vmem:[%s6 + $0x20] sm:$0xf]
    %v620 = vld [vmem:[%s6 + $0x24] sm:$0xf]
    %v621 = vld [vmem:[%s6 + $0x28] sm:$0xf]
    %v622 = vld [vmem:[%s6 + $0x2c] sm:$0xf]
    %v623 = vld [vmem:[%s6 + $0x30] sm:$0xf]
    %v624 = vld [vmem:[%s6 + $0x34] sm:$0xf]
    %v625 = vld [vmem:[%s6 + $0x38] sm:$0xf]
    %v626 = vld [vmem:[%s6 + $0x3c] sm:$0xf]
    %v627 = vld [vmem:[%s7] sm:$0x1]
    %v629 = vperm.slane %v627, 0
    %v633 = vunpack.c.l.b16 %v609
    %v634 = vunpack.c.l.b16 %v610
    %v635 = vpack.c.b16 %v634, %v633
    %v653 = vunpack.c.l.b16 %v611
    %v654 = vunpack.c.l.b16 %v612
    %v655 = vunpack.c.l.b16 %v613
    %v656 = vunpack.c.l.b16 %v614
    %v657 = vunpack.c.l.b16 %v615
    %v658 = vunpack.c.l.b16 %v616
    %v659 = vunpack.c.l.b16 %v617
    %v660 = vunpack.c.l.b16 %v618
    %v661 = vunpack.c.l.b16 %v619
    %v662 = vunpack.c.l.b16 %v620
    %v663 = vunpack.c.l.b16 %v621
    %v664 = vunpack.c.l.b16 %v622
    %v665 = vunpack.c.l.b16 %v623
    %v666 = vunpack.c.l.b16 %v624
    %v667 = vunpack.c.l.b16 %v625
    %v668 = vunpack.c.l.b16 %v626
    %v669 = vpack.c.b16 %v654, %v653
    %v670 = vpack.c.b16 %v656, %v655
    %v671 = vpack.c.b16 %v658, %v657
    %v672 = vpack.c.b16 %v660, %v659
    %v673 = vpack.c.b16 %v662, %v661
    %v674 = vpack.c.b16 %v664, %v663
    %v675 = vpack.c.b16 %v666, %v665
    %v676 = vpack.c.b16 %v668, %v667
    %685 = vmatpush.bf16.msra.mxu0 %v676
    %686 = vmatpush.bf16.msra.mxu0 %v675
    %687 = vmatpush.bf16.msra.mxu0 %v674
    %688 = vmatpush.bf16.msra.mxu0 %v673
    %689 = vmatpush.bf16.msra.mxu0 %v672
    %690 = vmatpush.bf16.msra.mxu0 %v671
    %691 = vmatpush.bf16.msra.mxu0 %v670
    %692 = vmatpush.bf16.msra.mxu0 %v669
    %693 = vmatmul.bf16.gmra.mxu0 %v635
    %v694 = vpop.f32.mrf.mxu0
    %v695 = vadd.f32 %v629, %v694
    %v696 = vpop.f32.mrf.mxu0
    %v697 = vadd.f32 %v629, %v696
    %698 = vdwg.mxu0
    %v699 = vunpack.c.l.bf16 %v178
    %v700 = vunpack.c.l.bf16 %v179
    %v701 = vadd.f32 %v695, %v699
    %v702 = vadd.f32 %v697, %v700
    %v703 = vld [vmem:[%s8] sm:$0x1]
    %v704 = vld [vmem:[%s9] sm:$0x1]
    %705 = vadd.xlane.f32.xlu0 %v701
    %v706 = vpop.xlane.xlu0 %705
    %707 = vadd.xlane.f32.xlu0 %v702
    %v708 = vpop.xlane.xlu0 %707
    %v709 = vmul.f32 %v706, %v131
    %v710 = vmul.f32 %v708, %v131
    %v711 = vsub.f32 %v701, %v709
    %v712 = vsub.f32 %v702, %v710
    %v713 = vmul.f32 %v711, %v711
    %v714 = vmul.f32 %v712, %v712
    %715 = vadd.xlane.f32.xlu0 %v713
    %v716 = vpop.xlane.xlu0 %715
    %717 = vadd.xlane.f32.xlu0 %v714
    %v718 = vpop.xlane.xlu0 %717
    %v719 = vmul.f32 %v716, %v131
    %v720 = vmul.f32 %v718, %v131
    %v721 = vadd.f32 %v719, 1e-12
    %v722 = vadd.f32 %v720, 1e-12
    %v723 = vrsqrt.pop %v721
    %v724 = vmul.f32 %v723, %v721
    %v725 = vmul.f32 %v724, %v723
    %v726 = vmul.f32 0.5, %v725
    %v727 = vsub.f32 1.5, %v726
    %v728 = vmul.f32 %v723, %v727
    %vm729 = vweird.f32 %v721
    %vm730 = vweird.f32 %v723
    %vm731 = vmor %vm729, %vm730
    %v732 = vsel %vm731, %v723, %v728
    %v733 = vrsqrt.pop %v722
    %v734 = vmul.f32 %v733, %v722
    %v735 = vmul.f32 %v734, %v733
    %v736 = vmul.f32 0.5, %v735
    %v737 = vsub.f32 1.5, %v736
    %v738 = vmul.f32 %v733, %v737
    %vm739 = vweird.f32 %v722
    %vm740 = vweird.f32 %v733
    %vm741 = vmor %vm739, %vm740
    %v742 = vsel %vm741, %v733, %v738
    %v743 = vmul.f32 %v711, %v732
    %v744 = vmul.f32 %v712, %v742
    %v746 = vperm.slane %v703, 0
    %v748 = vmul.f32 %v743, %v746
    %v749 = vmul.f32 %v744, %v746
    %v751 = vperm.slane %v704, 0
    %v753 = vadd.f32 %v748, %v751
    %v754 = vadd.f32 %v749, %v751
    %v755 = vpack.c.bf16 %v753, %v753
    %v756 = vpack.c.bf16 %v754, %v754
    %v757 = vld [vmem:[#allocation7] sm:$0xff]
    %v758 = vld [vmem:[#allocation7 + $0x8] sm:$0xff]
    %v759 = vld [vmem:[#allocation7 + $0x10] sm:$0xff]
    %v760 = vld [vmem:[#allocation7 + $0x18] sm:$0xff]
    %v761 = vld [vmem:[#allocation7 + $0x20] sm:$0xff]
    %v762 = vld [vmem:[#allocation7 + $0x28] sm:$0xff]
    %v763 = vld [vmem:[#allocation7 + $0x30] sm:$0xff]
    %v764 = vld [vmem:[#allocation7 + $0x38] sm:$0xff]
    %v765 = vld [vmem:[#allocation7 + $0x40] sm:$0xff]
    %v766 = vld [vmem:[#allocation7 + $0x48] sm:$0xff]
    %v767 = vld [vmem:[#allocation7 + $0x50] sm:$0xff]
    %v768 = vld [vmem:[#allocation7 + $0x58] sm:$0xff]
    %v769 = vld [vmem:[#allocation7 + $0x60] sm:$0xff]
    %v770 = vld [vmem:[#allocation7 + $0x68] sm:$0xff]
    %v771 = vld [vmem:[#allocation7 + $0x70] sm:$0xff]
    %v772 = vld [vmem:[#allocation7 + $0x78] sm:$0xff]
    %v773 = vld [vmem:[%s11] sm:$0x3]
    %v775 = vperm.slane %v773, 0
    %v776 = vperm.slane %v773, 1
    %v781 = vunpack.c.l.b16 %v755
    %v782 = vunpack.c.l.b16 %v756
    %v783 = vpack.c.b16 %v782, %v781
    %v801 = vunpack.c.l.b16 %v757
    %v802 = vunpack.c.h.b16 %v757
    %v803 = vunpack.c.l.b16 %v758
    %v804 = vunpack.c.h.b16 %v758
    %v805 = vunpack.c.l.b16 %v759
    %v806 = vunpack.c.h.b16 %v759
    %v807 = vunpack.c.l.b16 %v760
    %v808 = vunpack.c.h.b16 %v760
    %v809 = vunpack.c.l.b16 %v761
    %v810 = vunpack.c.h.b16 %v761
    %v811 = vunpack.c.l.b16 %v762
    %v812 = vunpack.c.h.b16 %v762
    %v813 = vunpack.c.l.b16 %v763
    %v814 = vunpack.c.h.b16 %v763
    %v815 = vunpack.c.l.b16 %v764
    %v816 = vunpack.c.h.b16 %v764
    %v817 = vunpack.c.l.b16 %v765
    %v818 = vunpack.c.h.b16 %v765
    %v819 = vunpack.c.l.b16 %v766
    %v820 = vunpack.c.h.b16 %v766
    %v821 = vunpack.c.l.b16 %v767
    %v822 = vunpack.c.h.b16 %v767
    %v823 = vunpack.c.l.b16 %v768
    %v824 = vunpack.c.h.b16 %v768
    %v825 = vunpack.c.l.b16 %v769
    %v826 = vunpack.c.h.b16 %v769
    %v827 = vunpack.c.l.b16 %v770
    %v828 = vunpack.c.h.b16 %v770
    %v829 = vunpack.c.l.b16 %v771
    %v830 = vunpack.c.h.b16 %v771
    %v831 = vunpack.c.l.b16 %v772
    %v832 = vunpack.c.h.b16 %v772
    %v833 = vpack.c.b16 %v803, %v801
    %v834 = vpack.c.b16 %v804, %v802
    %v835 = vpack.c.b16 %v807, %v805
    %v836 = vpack.c.b16 %v808, %v806
    %v837 = vpack.c.b16 %v811, %v809
    %v838 = vpack.c.b16 %v812, %v810
    %v839 = vpack.c.b16 %v815, %v813
    %v840 = vpack.c.b16 %v816, %v814
    %v841 = vpack.c.b16 %v819, %v817
    %v842 = vpack.c.b16 %v820, %v818
    %v843 = vpack.c.b16 %v823, %v821
    %v844 = vpack.c.b16 %v824, %v822
    %v845 = vpack.c.b16 %v827, %v825
    %v846 = vpack.c.b16 %v828, %v826
    %v847 = vpack.c.b16 %v831, %v829
    %v848 = vpack.c.b16 %v832, %v830
    %865 = vmatpush.bf16.msra.mxu0 %v847
    %866 = vmatpush.bf16.msra.mxu0 %v845
    %867 = vmatpush.bf16.msra.mxu0 %v843
    %868 = vmatpush.bf16.msra.mxu0 %v841
    %869 = vmatpush.bf16.msra.mxu0 %v839
    %870 = vmatpush.bf16.msra.mxu0 %v837
    %871 = vmatpush.bf16.msra.mxu0 %v835
    %872 = vmatpush.bf16.msra.mxu0 %v833
    %873 = vmatmul.bf16.gmra.mxu0 %v783
    %v874 = vpop.f32.mrf.mxu0
    %v875 = vadd.f32 %v775, %v874
    %v876 = vpop.f32.mrf.mxu0
    %v877 = vadd.f32 %v775, %v876
    %878 = vdwg.mxu0
    %879 = vmatpush.bf16.msra.mxu0 %v848
    %880 = vmatpush.bf16.msra.mxu0 %v846
    %881 = vmatpush.bf16.msra.mxu0 %v844
    %882 = vmatpush.bf16.msra.mxu0 %v842
    %883 = vmatpush.bf16.msra.mxu0 %v840
    %884 = vmatpush.bf16.msra.mxu0 %v838
    %885 = vmatpush.bf16.msra.mxu0 %v836
    %886 = vmatpush.bf16.msra.mxu0 %v834
    %887 = vmatmul.bf16.gmra.mxu0 %v783
    %v888 = vpop.f32.mrf.mxu0
    %v889 = vadd.f32 %v776, %v888
    %v890 = vpop.f32.mrf.mxu0
    %v891 = vadd.f32 %v776, %v890
    %892 = vdwg.mxu0
    %v893 = vmul.f32 %v875, 0.5
    %v894 = vmul.f32 %v889, 0.5
    %v895 = vmul.f32 %v877, 0.5
    %v896 = vmul.f32 %v891, 0.5
    %v897 = vmul.f32 %v875, 0.044715
    %v898 = vmul.f32 %v889, 0.044715
    %v899 = vmul.f32 %v877, 0.044715
    %v900 = vmul.f32 %v891, 0.044715
    %v901 = vmul.f32 %v897, %v875
    %v902 = vmul.f32 %v898, %v889
    %v903 = vmul.f32 %v899, %v877
    %v904 = vmul.f32 %v900, %v891
    %v905 = vmul.f32 %v901, %v875
    %v906 = vmul.f32 %v902, %v889
    %v907 = vmul.f32 %v903, %v877
    %v908 = vmul.f32 %v904, %v891
    %v909 = vadd.f32 %v875, %v905
    %v910 = vadd.f32 %v889, %v906
    %v911 = vadd.f32 %v877, %v907
    %v912 = vadd.f32 %v891, %v908
    %v913 = vmul.f32 %v909, 0.7978846
    %v914 = vmul.f32 %v910, 0.7978846
    %v915 = vmul.f32 %v911, 0.7978846
    %v916 = vmul.f32 %v912, 0.7978846
    %v917 = vtanh.pop %v913
    %v918 = vtanh.pop %v914
    %v919 = vtanh.pop %v915
    %v920 = vtanh.pop %v916
    %v921 = vadd.f32 %v917, 1.0
    %v922 = vadd.f32 %v918, 1.0
    %v923 = vadd.f32 %v919, 1.0
    %v924 = vadd.f32 %v920, 1.0
    %v925 = vmul.f32 %v893, %v921
    %v926 = vmul.f32 %v894, %v922
    %v927 = vmul.f32 %v895, %v923
    %v928 = vmul.f32 %v896, %v924
    %v929 = vpack.c.bf16 %v927, %v925
    %v930 = vpack.c.bf16 %v928, %v926
    %v931 = vld [vmem:[#allocation9] sm:$0xf]
    %v932 = vld [vmem:[#allocation9 + $0x4] sm:$0xf]
    %v933 = vld [vmem:[#allocation9 + $0x8] sm:$0xf]
    %v934 = vld [vmem:[#allocation9 + $0xc] sm:$0xf]
    %v935 = vld [vmem:[#allocation9 + $0x10] sm:$0xf]
    %v936 = vld [vmem:[#allocation9 + $0x14] sm:$0xf]
    %v937 = vld [vmem:[#allocation9 + $0x18] sm:$0xf]
    %v938 = vld [vmem:[#allocation9 + $0x1c] sm:$0xf]
    %v939 = vld [vmem:[#allocation9 + $0x20] sm:$0xf]
    %v940 = vld [vmem:[#allocation9 + $0x24] sm:$0xf]
    %v941 = vld [vmem:[#allocation9 + $0x28] sm:$0xf]
    %v942 = vld [vmem:[#allocation9 + $0x2c] sm:$0xf]
    %v943 = vld [vmem:[#allocation9 + $0x30] sm:$0xf]
    %v944 = vld [vmem:[#allocation9 + $0x34] sm:$0xf]
    %v945 = vld [vmem:[#allocation9 + $0x38] sm:$0xf]
    %v946 = vld [vmem:[#allocation9 + $0x3c] sm:$0xf]
    %v947 = vld [vmem:[#allocation9 + $0x40] sm:$0xf]
    %v948 = vld [vmem:[#allocation9 + $0x44] sm:$0xf]
    %v949 = vld [vmem:[#allocation9 + $0x48] sm:$0xf]
    %v950 = vld [vmem:[#allocation9 + $0x4c] sm:$0xf]
    %v951 = vld [vmem:[#allocation9 + $0x50] sm:$0xf]
    %v952 = vld [vmem:[#allocation9 + $0x54] sm:$0xf]
    %v953 = vld [vmem:[#allocation9 + $0x58] sm:$0xf]
    %v954 = vld [vmem:[#allocation9 + $0x5c] sm:$0xf]
    %v955 = vld [vmem:[#allocation9 + $0x60] sm:$0xf]
    %v956 = vld [vmem:[#allocation9 + $0x64] sm:$0xf]
    %v957 = vld [vmem:[#allocation9 + $0x68] sm:$0xf]
    %v958 = vld [vmem:[#allocation9 + $0x6c] sm:$0xf]
    %v959 = vld [vmem:[#allocation9 + $0x70] sm:$0xf]
    %v960 = vld [vmem:[#allocation9 + $0x74] sm:$0xf]
    %v961 = vld [vmem:[#allocation9 + $0x78] sm:$0xf]
    %v962 = vld [vmem:[#allocation9 + $0x7c] sm:$0xf]
    %v963 = vld [vmem:[%s13] sm:$0x1]
    %v965 = vperm.slane %v963, 0
    %v999 = vunpack.c.l.b16 %v931
    %v1000 = vunpack.c.l.b16 %v932
    %v1001 = vunpack.c.l.b16 %v933
    %v1002 = vunpack.c.l.b16 %v934
    %v1003 = vunpack.c.l.b16 %v935
    %v1004 = vunpack.c.l.b16 %v936
    %v1005 = vunpack.c.l.b16 %v937
    %v1006 = vunpack.c.l.b16 %v938
    %v1007 = vunpack.c.l.b16 %v939
    %v1008 = vunpack.c.l.b16 %v940
    %v1009 = vunpack.c.l.b16 %v941
    %v1010 = vunpack.c.l.b16 %v942
    %v1011 = vunpack.c.l.b16 %v943
    %v1012 = vunpack.c.l.b16 %v944
    %v1013 = vunpack.c.l.b16 %v945
    %v1014 = vunpack.c.l.b16 %v946
    %v1015 = vunpack.c.l.b16 %v947
    %v1016 = vunpack.c.l.b16 %v948
    %v1017 = vunpack.c.l.b16 %v949
    %v1018 = vunpack.c.l.b16 %v950
    %v1019 = vunpack.c.l.b16 %v951
    %v1020 = vunpack.c.l.b16 %v952
    %v1021 = vunpack.c.l.b16 %v953
    %v1022 = vunpack.c.l.b16 %v954
    %v1023 = vunpack.c.l.b16 %v955
    %v1024 = vunpack.c.l.b16 %v956
    %v1025 = vunpack.c.l.b16 %v957
    %v1026 = vunpack.c.l.b16 %v958
    %v1027 = vunpack.c.l.b16 %v959
    %v1028 = vunpack.c.l.b16 %v960
    %v1029 = vunpack.c.l.b16 %v961
    %v1030 = vunpack.c.l.b16 %v962
    %v1031 = vpack.c.b16 %v1000, %v999
    %v1032 = vpack.c.b16 %v1002, %v1001
    %v1033 = vpack.c.b16 %v1004, %v1003
    %v1034 = vpack.c.b16 %v1006, %v1005
    %v1035 = vpack.c.b16 %v1008, %v1007
    %v1036 = vpack.c.b16 %v1010, %v1009
    %v1037 = vpack.c.b16 %v1012, %v1011
    %v1038 = vpack.c.b16 %v1014, %v1013
    %v1039 = vpack.c.b16 %v1016, %v1015
    %v1040 = vpack.c.b16 %v1018, %v1017
    %v1041 = vpack.c.b16 %v1020, %v1019
    %v1042 = vpack.c.b16 %v1022, %v1021
    %v1043 = vpack.c.b16 %v1024, %v1023
    %v1044 = vpack.c.b16 %v1026, %v1025
    %v1045 = vpack.c.b16 %v1028, %v1027
    %v1046 = vpack.c.b16 %v1030, %v1029
    %1063 = vmatpush.bf16.msra.mxu0 %v1038
    %1064 = vmatpush.bf16.msra.mxu0 %v1037
    %1065 = vmatpush.bf16.msra.mxu0 %v1036
    %1066 = vmatpush.bf16.msra.mxu0 %v1035
    %1067 = vmatpush.bf16.msra.mxu0 %v1034
    %1068 = vmatpush.bf16.msra.mxu0 %v1033
    %1069 = vmatpush.bf16.msra.mxu0 %v1032
    %1070 = vmatpush.bf16.msra.mxu0 %v1031
    %1071 = vmatmul.bf16.gmra.mxu0 %v929
    %v1072 = vpop.f32.mrf.mxu0
    %v1073 = vadd.f32 %v965, %v1072
    %v1074 = vpop.f32.mrf.mxu0
    %v1075 = vadd.f32 %v965, %v1074
    %1076 = vdwg.mxu0
    %1077 = vmatpush.bf16.msra.mxu0 %v1046
    %1078 = vmatpush.bf16.msra.mxu0 %v1045
    %1079 = vmatpush.bf16.msra.mxu0 %v1044
    %1080 = vmatpush.bf16.msra.mxu0 %v1043
    %1081 = vmatpush.bf16.msra.mxu0 %v1042
    %1082 = vmatpush.bf16.msra.mxu0 %v1041
    %1083 = vmatpush.bf16.msra.mxu0 %v1040
    %1084 = vmatpush.bf16.msra.mxu0 %v1039
    %1085 = vmatmul.bf16.gmra.mxu0 %v930
    %v1086 = vpop.f32.mrf.mxu0
    %v1087 = vadd.f32 %v1073, %v1086
    %v1088 = vpop.f32.mrf.mxu0
    %v1089 = vadd.f32 %v1075, %v1088
    %1090 = vdwg.mxu0
    %v1091 = vunpack.c.l.bf16 %v755
    %v1092 = vunpack.c.l.bf16 %v756
    %v1093 = vadd.f32 %v1087, %v1091
    %v1094 = vadd.f32 %v1089, %v1092
    %v1095 = vld [vmem:[%s14] sm:$0x1]
    %v1096 = vld [vmem:[%s15] sm:$0x1]
    %1097 = vadd.xlane.f32.xlu0 %v1093
    %v1098 = vpop.xlane.xlu0 %1097
    %1099 = vadd.xlane.f32.xlu0 %v1094
    %v1100 = vpop.xlane.xlu0 %1099
    %v1101 = vmul.f32 %v1098, %v131
    %v1102 = vmul.f32 %v1100, %v131
    %v1103 = vsub.f32 %v1093, %v1101
    %v1104 = vsub.f32 %v1094, %v1102
    %v1105 = vmul.f32 %v1103, %v1103
    %v1106 = vmul.f32 %v1104, %v1104
    %1107 = vadd.xlane.f32.xlu0 %v1105
    %v1108 = vpop.xlane.xlu0 %1107
    %1109 = vadd.xlane.f32.xlu0 %v1106
    %v1110 = vpop.xlane.xlu0 %1109
    %v1111 = vmul.f32 %v1108, %v131
    %v1112 = vmul.f32 %v1110, %v131
    %v1113 = vadd.f32 %v1111, 1e-12
    %v1114 = vadd.f32 %v1112, 1e-12
    %v1115 = vrsqrt.pop %v1113
    %v1116 = vmul.f32 %v1115, %v1113
    %v1117 = vmul.f32 %v1116, %v1115
    %v1118 = vmul.f32 0.5, %v1117
    %v1119 = vsub.f32 1.5, %v1118
    %v1120 = vmul.f32 %v1115, %v1119
    %vm1121 = vweird.f32 %v1113
    %vm1122 = vweird.f32 %v1115
    %vm1123 = vmor %vm1121, %vm1122
    %v1124 = vsel %vm1123, %v1115, %v1120
    %v1125 = vrsqrt.pop %v1114
    %v1126 = vmul.f32 %v1125, %v1114
    %v1127 = vmul.f32 %v1126, %v1125
    %v1128 = vmul.f32 0.5, %v1127
    %v1129 = vsub.f32 1.5, %v1128
    %v1130 = vmul.f32 %v1125, %v1129
    %vm1131 = vweird.f32 %v1114
    %vm1132 = vweird.f32 %v1125
    %vm1133 = vmor %vm1131, %vm1132
    %v1134 = vsel %vm1133, %v1125, %v1130
    %v1135 = vmul.f32 %v1103, %v1124
    %v1136 = vmul.f32 %v1104, %v1134
    %v1138 = vperm.slane %v1095, 0
    %v1140 = vmul.f32 %v1135, %v1138
    %v1141 = vmul.f32 %v1136, %v1138
    %v1143 = vperm.slane %v1096, 0
    %v1145 = vadd.f32 %v1140, %v1143
    %v1146 = vadd.f32 %v1141, %v1143
    %v1147 = vpack.c.bf16 %v1145, %v1145
    %v1148 = vpack.c.bf16 %v1146, %v1146
    %s1149 = scalar_lea.vmem [#allocation5], 192
    %v1150 = vld [vmem:[%s1149] sm:$0xff]
    %v1151 = vld [vmem:[%s1149 + $0x8] sm:$0xf]
    %v1152 = vld [vmem:[%s1149 + $0xc] sm:$0xff]
    %v1153 = vld [vmem:[%s1149 + $0x14] sm:$0xf]
    %v1154 = vld [vmem:[%s1149 + $0x18] sm:$0xff]
    %v1155 = vld [vmem:[%s1149 + $0x20] sm:$0xf]
    %v1156 = vld [vmem:[%s1149 + $0x24] sm:$0xff]
    %v1157 = vld [vmem:[%s1149 + $0x2c] sm:$0xf]
    %v1158 = vld [vmem:[%s1149 + $0x30] sm:$0xff]
    %v1159 = vld [vmem:[%s1149 + $0x38] sm:$0xf]
    %v1160 = vld [vmem:[%s1149 + $0x3c] sm:$0xff]
    %v1161 = vld [vmem:[%s1149 + $0x44] sm:$0xf]
    %v1162 = vld [vmem:[%s1149 + $0x48] sm:$0xff]
    %v1163 = vld [vmem:[%s1149 + $0x50] sm:$0xf]
    %v1164 = vld [vmem:[%s1149 + $0x54] sm:$0xff]
    %v1165 = vld [vmem:[%s1149 + $0x5c] sm:$0xf]
    %v1166 = vld [vmem:[%s1149 + $0x60] sm:$0xff]
    %v1167 = vld [vmem:[%s1149 + $0x68] sm:$0xf]
    %v1168 = vld [vmem:[%s1149 + $0x6c] sm:$0xff]
    %v1169 = vld [vmem:[%s1149 + $0x74] sm:$0xf]
    %v1170 = vld [vmem:[%s1149 + $0x78] sm:$0xff]
    %v1171 = vld [vmem:[%s1149 + $0x80] sm:$0xf]
    %v1172 = vld [vmem:[%s1149 + $0x84] sm:$0xff]
    %v1173 = vld [vmem:[%s1149 + $0x8c] sm:$0xf]
    %v1174 = vld [vmem:[%s1149 + $0x90] sm:$0xff]
    %v1175 = vld [vmem:[%s1149 + $0x98] sm:$0xf]
    %v1176 = vld [vmem:[%s1149 + $0x9c] sm:$0xff]
    %v1177 = vld [vmem:[%s1149 + $0xa4] sm:$0xf]
    %v1178 = vld [vmem:[%s1149 + $0xa8] sm:$0xff]
    %v1179 = vld [vmem:[%s1149 + $0xb0] sm:$0xf]
    %v1180 = vld [vmem:[%s1149 + $0xb4] sm:$0xff]
    %v1181 = vld [vmem:[%s1149 + $0xbc] sm:$0xf]
    %s1182 = scalar_lea.vmem %s5, 3
    %v1183 = vld [vmem:[%s1182] sm:$0x7]
    %v1185 = vperm.slane %v1183, 0
    %v1186 = vperm.slane %v1183, 1
    %v1187 = vperm.slane %v1183, 2
    %v1193 = vunpack.c.l.b16 %v1147
    %v1194 = vunpack.c.l.b16 %v1148
    %v1195 = vpack.c.b16 %v1194, %v1193
    %v1229 = vunpack.c.l.b16 %v1150
    %v1230 = vunpack.c.h.b16 %v1150
    %v1231 = vunpack.c.l.b16 %v1151
    %v1232 = vunpack.c.l.b16 %v1152
    %v1233 = vunpack.c.h.b16 %v1152
    %v1234 = vunpack.c.l.b16 %v1153
    %v1235 = vunpack.c.l.b16 %v1154
    %v1236 = vunpack.c.h.b16 %v1154
    %v1237 = vunpack.c.l.b16 %v1155
    %v1238 = vunpack.c.l.b16 %v1156
    %v1239 = vunpack.c.h.b16 %v1156
    %v1240 = vunpack.c.l.b16 %v1157
    %v1241 = vunpack.c.l.b16 %v1158
    %v1242 = vunpack.c.h.b16 %v1158
    %v1243 = vunpack.c.l.b16 %v1159
    %v1244 = vunpack.c.l.b16 %v1160
    %v1245 = vunpack.c.h.b16 %v1160
    %v1246 = vunpack.c.l.b16 %v1161
    %v1247 = vunpack.c.l.b16 %v1162
    %v1248 = vunpack.c.h.b16 %v1162
    %v1249 = vunpack.c.l.b16 %v1163
    %v1250 = vunpack.c.l.b16 %v1164
    %v1251 = vunpack.c.h.b16 %v1164
    %v1252 = vunpack.c.l.b16 %v1165
    %v1253 = vunpack.c.l.b16 %v1166
    %v1254 = vunpack.c.h.b16 %v1166
    %v1255 = vunpack.c.l.b16 %v1167
    %v1256 = vunpack.c.l.b16 %v1168
    %v1257 = vunpack.c.h.b16 %v1168
    %v1258 = vunpack.c.l.b16 %v1169
    %v1259 = vunpack.c.l.b16 %v1170
    %v1260 = vunpack.c.h.b16 %v1170
    %v1261 = vunpack.c.l.b16 %v1171
    %v1262 = vunpack.c.l.b16 %v1172
    %v1263 = vunpack.c.h.b16 %v1172
    %v1264 = vunpack.c.l.b16 %v1173
    %v1265 = vunpack.c.l.b16 %v1174
    %v1266 = vunpack.c.h.b16 %v1174
    %v1267 = vunpack.c.l.b16 %v1175
    %v1268 = vunpack.c.l.b16 %v1176
    %v1269 = vunpack.c.h.b16 %v1176
    %v1270 = vunpack.c.l.b16 %v1177
    %v1271 = vunpack.c.l.b16 %v1178
    %v1272 = vunpack.c.h.b16 %v1178
    %v1273 = vunpack.c.l.b16 %v1179
    %v1274 = vunpack.c.l.b16 %v1180
    %v1275 = vunpack.c.h.b16 %v1180
    %v1276 = vunpack.c.l.b16 %v1181
    %v1277 = vpack.c.b16 %v1232, %v1229
    %v1278 = vpack.c.b16 %v1233, %v1230
    %v1279 = vpack.c.b16 %v1234, %v1231
    %v1280 = vpack.c.b16 %v1238, %v1235
    %v1281 = vpack.c.b16 %v1239, %v1236
    %v1282 = vpack.c.b16 %v1240, %v1237
    %v1283 = vpack.c.b16 %v1244, %v1241
    %v1284 = vpack.c.b16 %v1245, %v1242
    %v1285 = vpack.c.b16 %v1246, %v1243
    %v1286 = vpack.c.b16 %v1250, %v1247
    %v1287 = vpack.c.b16 %v1251, %v1248
    %v1288 = vpack.c.b16 %v1252, %v1249
    %v1289 = vpack.c.b16 %v1256, %v1253
    %v1290 = vpack.c.b16 %v1257, %v1254
    %v1291 = vpack.c.b16 %v1258, %v1255
    %v1292 = vpack.c.b16 %v1262, %v1259
    %v1293 = vpack.c.b16 %v1263, %v1260
    %v1294 = vpack.c.b16 %v1264, %v1261
    %v1295 = vpack.c.b16 %v1268, %v1265
    %v1296 = vpack.c.b16 %v1269, %v1266
    %v1297 = vpack.c.b16 %v1270, %v1267
    %v1298 = vpack.c.b16 %v1274, %v1271
    %v1299 = vpack.c.b16 %v1275, %v1272
    %v1300 = vpack.c.b16 %v1276, %v1273
    %1325 = vmatpush.bf16.msra.mxu0 %v1298
    %1326 = vmatpush.bf16.msra.mxu0 %v1295
    %1327 = vmatpush.bf16.msra.mxu0 %v1292
    %1328 = vmatpush.bf16.msra.mxu0 %v1289
    %1329 = vmatpush.bf16.msra.mxu0 %v1286
    %1330 = vmatpush.bf16.msra.mxu0 %v1283
    %1331 = vmatpush.bf16.msra.mxu0 %v1280
    %1332 = vmatpush.bf16.msra.mxu0 %v1277
    %1333 = vmatmul.bf16.gmra.mxu0 %v1195
    %v1334 = vpop.f32.mrf.mxu0
    %v1335 = vadd.f32 %v1185, %v1334
    %v1336 = vpop.f32.mrf.mxu0
    %v1337 = vadd.f32 %v1185, %v1336
    %1338 = vdwg.mxu0
    %1339 = vmatpush.bf16.msra.mxu0 %v1299
    %1340 = vmatpush.bf16.msra.mxu0 %v1296
    %1341 = vmatpush.bf16.msra.mxu0 %v1293
    %1342 = vmatpush.bf16.msra.mxu0 %v1290
    %1343 = vmatpush.bf16.msra.mxu0 %v1287
    %1344 = vmatpush.bf16.msra.mxu0 %v1284
    %1345 = vmatpush.bf16.msra.mxu0 %v1281
    %1346 = vmatpush.bf16.msra.mxu0 %v1278
    %1347 = vmatmul.bf16.gmra.mxu0 %v1195
    %v1348 = vpop.f32.mrf.mxu0
    %v1349 = vadd.f32 %v1186, %v1348
    %v1350 = vpop.f32.mrf.mxu0
    %v1351 = vadd.f32 %v1186, %v1350
    %1352 = vdwg.mxu0
    %1353 = vmatpush.bf16.msra.mxu0 %v1300
    %1354 = vmatpush.bf16.msra.mxu0 %v1297
    %1355 = vmatpush.bf16.msra.mxu0 %v1294
    %1356 = vmatpush.bf16.msra.mxu0 %v1291
    %1357 = vmatpush.bf16.msra.mxu0 %v1288
    %1358 = vmatpush.bf16.msra.mxu0 %v1285
    %1359 = vmatpush.bf16.msra.mxu0 %v1282
    %1360 = vmatpush.bf16.msra.mxu0 %v1279
    %1361 = vmatmul.bf16.gmra.mxu0 %v1195
    %v1362 = vpop.f32.mrf.mxu0
    %v1363 = vadd.f32 %v1187, %v1362
    %v1364 = vpop.f32.mrf.mxu0
    %v1365 = vadd.f32 %v1187, %v1364
    %1366 = vdwg.mxu0
    %v1367 = vpack.c.bf16 %v1337, %v1335
    %v1368 = vpack.c.bf16 %v1351, %v1349
    %v1369 = vpack.c.bf16 %v1365, %v1363
    %v1371 = vsel %vm399, %v1367, 0
    %v1374 = vsel %vm399, %v1368, 0
    %1376 = vmatpush.bf16.xpose.msra.mxu0 0
    %1377 = vmatpush.bf16.xpose.msra.mxu0 0
    %1378 = vmatpush.bf16.xpose.msra.mxu0 0
    %1379 = vmatpush.bf16.xpose.msra.mxu0 0
    %1380 = vmatpush.bf16.xpose.msra.mxu0 0
    %1381 = vmatpush.bf16.xpose.msra.mxu0 0
    %1382 = vmatpush.bf16.xpose.msra.mxu0 0
    %1383 = vmatpush.bf16.xpose.msra.mxu0 %v1374
    %1384 = vmatmul.bf16.gmra.mxu0 %v1371
    %v1385 = vpop.f32.mrf.mxu0
    %v1386 = vadd.f32 0.0, %v1385
    %v1387 = vpop.f32.mrf.mxu0
    %v1388 = vadd.f32 0.0, %v1387
    %1389 = vdwg.mxu0
    %v1390 = vmul.f32 %v1386, 0.125
    %v1391 = vmul.f32 %v1388, 0.125
    %v1392 = vadd.f32 %v1390, %v115
    %v1393 = vadd.f32 %v1391, %v116
    %v1394 = vsel %vm424, %v1392, -inf
    %1395 = vmax.xlane.f32.xlu0 %v1394
    %v1396 = vpop.xlane.xlu0 %1395
    %v1397 = vsel %vm424, %v1393, -inf
    %1398 = vmax.xlane.f32.xlu0 %v1397
    %v1399 = vpop.xlane.xlu0 %1398
    %v1400 = vsub.f32 %v1392, %v1396
    %v1401 = vsub.f32 %v1393, %v1399
    %v1402 = vmul.f32 %v1400, 1.442695
    %v1403 = vpow.pop %v1402
    %v1404 = vmul.f32 %v1401, 1.442695
    %v1405 = vpow.pop %v1404
    %v1406 = vsel %vm424, %v1403, 0.0
    %1407 = vadd.xlane.f32.xlu0 %v1406
    %v1408 = vpop.xlane.xlu0 %1407
    %v1409 = vsel %vm424, %v1405, 0.0
    %1410 = vadd.xlane.f32.xlu0 %v1409
    %v1411 = vpop.xlane.xlu0 %1410
    %v1412 = vrcp.pop %v1408
    %v1413 = vmul.f32 %v1408, %v1412
    %v1414 = vsub.f32 1.0, %v1413
    %v1415 = vmul.f32 %v1412, %v1414
    %v1416 = vadd.f32 %v1412, %v1415
    %vm1417 = vweird.f32 %v1408
    %vm1418 = vweird.f32 %v1412
    %vm1419 = vmor %vm1417, %vm1418
    %v1420 = vsel %vm1419, %v1412, %v1416
    %v1421 = vand.u32 2147483647, %v1408
    %vm1422 = vcmp.eq.f32.partialorder %v1421, 8.507059e+37
    %v1423 = vand.u32 %v1408, 2147483648
    %v1424 = vor.u32 1.1754944e-38, %v1423
    %v1425 = vsel %vm1422, %v1424, %v1420
    %v1426 = vmul.f32 %v1403, %v1425
    %v1427 = vrcp.pop %v1411
    %v1428 = vmul.f32 %v1411, %v1427
    %v1429 = vsub.f32 1.0, %v1428
    %v1430 = vmul.f32 %v1427, %v1429
    %v1431 = vadd.f32 %v1427, %v1430
    %vm1432 = vweird.f32 %v1411
    %vm1433 = vweird.f32 %v1427
    %vm1434 = vmor %vm1432, %vm1433
    %v1435 = vsel %vm1434, %v1427, %v1431
    %v1436 = vand.u32 2147483647, %v1411
    %vm1437 = vcmp.eq.f32.partialorder %v1436, 8.507059e+37
    %v1438 = vand.u32 %v1411, 2147483648
    %v1439 = vor.u32 1.1754944e-38, %v1438
    %v1440 = vsel %vm1437, %v1439, %v1435
    %v1441 = vmul.f32 %v1405, %v1440
    %v1442 = vpack.c.bf16 %v1441, %v1426
    %v1444 = vsel %vm424, %v1442, 0
    %1446 = vmatpush.bf16.msra.mxu0 0
    %1447 = vmatpush.bf16.msra.mxu0 0
    %1448 = vmatpush.bf16.msra.mxu0 0
    %1449 = vmatpush.bf16.msra.mxu0 0
    %1450 = vmatpush.bf16.msra.mxu0 0
    %1451 = vmatpush.bf16.msra.mxu0 0
    %1452 = vmatpush.bf16.msra.mxu0 0
    %1453 = vmatpush.bf16.msra.mxu0 %v1369
    %1454 = vmatmul.bf16.gmra.mxu0 %v1444
    %v1455 = vpop.f32.mrf.mxu0
    %v1456 = vadd.f32 0.0, %v1455
    %v1457 = vpop.f32.mrf.mxu0
    %v1458 = vadd.f32 0.0, %v1457
    %1459 = vdwg.mxu0
    %v1460 = vpack.c.bf16 %v1456, %v1456
    %v1461 = vpack.c.bf16 %v1458, %v1458
    %1462 = vst.msk [vmem:[#allocation2] sm:$0xf] %vm493, %v1460
    %1463 = vst.msk [vmem:[#allocation2 + $0x4] sm:$0xf] %vm493, %v1461
    %1465 = vrot.lane.b32.xlu0 %v1367, 64
    %v1466 = vpop.permute.xlu0 %1465
    %1468 = vrot.lane.b32.xlu0 %v1368, 64
    %v1469 = vpop.permute.xlu0 %1468
    %v1471 = vsel %vm399, %v1466, 0
    %v1474 = vsel %vm399, %v1469, 0
    %1476 = vmatpush.bf16.xpose.msra.mxu0 0
    %1477 = vmatpush.bf16.xpose.msra.mxu0 0
    %1478 = vmatpush.bf16.xpose.msra.mxu0 0
    %1479 = vmatpush.bf16.xpose.msra.mxu0 0
    %1480 = vmatpush.bf16.xpose.msra.mxu0 0
    %1481 = vmatpush.bf16.xpose.msra.mxu0 0
    %1482 = vmatpush.bf16.xpose.msra.mxu0 0
    %1483 = vmatpush.bf16.xpose.msra.mxu0 %v1474
    %1484 = vmatmul.bf16.gmra.mxu0 %v1471
    %v1485 = vpop.f32.mrf.mxu0
    %v1486 = vadd.f32 0.0, %v1485
    %v1487 = vpop.f32.mrf.mxu0
    %v1488 = vadd.f32 0.0, %v1487
    %1489 = vdwg.mxu0
    %v1490 = vmul.f32 %v1486, 0.125
    %v1491 = vmul.f32 %v1488, 0.125
    %v1492 = vadd.f32 %v1490, %v115
    %v1493 = vadd.f32 %v1491, %v116
    %v1494 = vsel %vm424, %v1492, -inf
    %1495 = vmax.xlane.f32.xlu0 %v1494
    %v1496 = vpop.xlane.xlu0 %1495
    %v1497 = vsel %vm424, %v1493, -inf
    %1498 = vmax.xlane.f32.xlu0 %v1497
    %v1499 = vpop.xlane.xlu0 %1498
    %v1500 = vsub.f32 %v1492, %v1496
    %v1501 = vsub.f32 %v1493, %v1499
    %v1502 = vmul.f32 %v1500, 1.442695
    %v1503 = vpow.pop %v1502
    %v1504 = vmul.f32 %v1501, 1.442695
    %v1505 = vpow.pop %v1504
    %v1506 = vsel %vm424, %v1503, 0.0
    %1507 = vadd.xlane.f32.xlu0 %v1506
    %v1508 = vpop.xlane.xlu0 %1507
    %v1509 = vsel %vm424, %v1505, 0.0
    %1510 = vadd.xlane.f32.xlu0 %v1509
    %v1511 = vpop.xlane.xlu0 %1510
    %v1512 = vrcp.pop %v1508
    %v1513 = vmul.f32 %v1508, %v1512
    %v1514 = vsub.f32 1.0, %v1513
    %v1515 = vmul.f32 %v1512, %v1514
    %v1516 = vadd.f32 %v1512, %v1515
    %vm1517 = vweird.f32 %v1508
    %vm1518 = vweird.f32 %v1512
    %vm1519 = vmor %vm1517, %vm1518
    %v1520 = vsel %vm1519, %v1512, %v1516
    %v1521 = vand.u32 2147483647, %v1508
    %vm1522 = vcmp.eq.f32.partialorder %v1521, 8.507059e+37
    %v1523 = vand.u32 %v1508, 2147483648
    %v1524 = vor.u32 1.1754944e-38, %v1523
    %v1525 = vsel %vm1522, %v1524, %v1520
    %v1526 = vmul.f32 %v1503, %v1525
    %v1527 = vrcp.pop %v1511
    %v1528 = vmul.f32 %v1511, %v1527
    %v1529 = vsub.f32 1.0, %v1528
    %v1530 = vmul.f32 %v1527, %v1529
    %v1531 = vadd.f32 %v1527, %v1530
    %vm1532 = vweird.f32 %v1511
    %vm1533 = vweird.f32 %v1527
    %vm1534 = vmor %vm1532, %vm1533
    %v1535 = vsel %vm1534, %v1527, %v1531
    %v1536 = vand.u32 2147483647, %v1511
    %vm1537 = vcmp.eq.f32.partialorder %v1536, 8.507059e+37
    %v1538 = vand.u32 %v1511, 2147483648
    %v1539 = vor.u32 1.1754944e-38, %v1538
    %v1540 = vsel %vm1537, %v1539, %v1535
    %v1541 = vmul.f32 %v1505, %v1540
    %v1542 = vpack.c.bf16 %v1541, %v1526
    %1544 = vrot.lane.b32.xlu0 %v1369, 64
    %v1545 = vpop.permute.xlu0 %1544
    %v1548 = vsel %vm424, %v1542, 0
    %1550 = vmatpush.bf16.msra.mxu0 0
    %1551 = vmatpush.bf16.msra.mxu0 0
    %1552 = vmatpush.bf16.msra.mxu0 0
    %1553 = vmatpush.bf16.msra.mxu0 0
    %1554 = vmatpush.bf16.msra.mxu0 0
    %1555 = vmatpush.bf16.msra.mxu0 0
    %1556 = vmatpush.bf16.msra.mxu0 0
    %1557 = vmatpush.bf16.msra.mxu0 %v1545
    %1558 = vmatmul.bf16.gmra.mxu0 %v1548
    %v1559 = vpop.f32.mrf.mxu0
    %v1560 = vadd.f32 0.0, %v1559
    %v1561 = vpop.f32.mrf.mxu0
    %v1562 = vadd.f32 0.0, %v1561
    %1563 = vdwg.mxu0
    %v1564 = vpack.c.bf16 %v1560, %v1560
    %v1565 = vpack.c.bf16 %v1562, %v1562
    %1568 = vrot.lane.b32.xlu0 %v1564, 64
    %v1569 = vpop.permute.xlu0 %1568
    %1570 = vrot.lane.b32.xlu0 %v1565, 64
    %v1571 = vpop.permute.xlu0 %1570
    %1574 = vst.msk [vmem:[#allocation2] sm:$0xf] %vm606, %v1569
    %1575 = vst.msk [vmem:[#allocation2 + $0x4] sm:$0xf] %vm606, %v1571
    %v1576 = vld [vmem:[#allocation2] sm:$0xf]
    %v1577 = vld [vmem:[#allocation2 + $0x4] sm:$0xf]
    %s1578 = scalar_lea.vmem %s6, 64
    %v1579 = vld [vmem:[%s1578] sm:$0xf]
    %v1580 = vld [vmem:[%s1578 + $0x4] sm:$0xf]
    %v1581 = vld [vmem:[%s1578 + $0x8] sm:$0xf]
    %v1582 = vld [vmem:[%s1578 + $0xc] sm:$0xf]
    %v1583 = vld [vmem:[%s1578 + $0x10] sm:$0xf]
    %v1584 = vld [vmem:[%s1578 + $0x14] sm:$0xf]
    %v1585 = vld [vmem:[%s1578 + $0x18] sm:$0xf]
    %v1586 = vld [vmem:[%s1578 + $0x1c] sm:$0xf]
    %v1587 = vld [vmem:[%s1578 + $0x20] sm:$0xf]
    %v1588 = vld [vmem:[%s1578 + $0x24] sm:$0xf]
    %v1589 = vld [vmem:[%s1578 + $0x28] sm:$0xf]
    %v1590 = vld [vmem:[%s1578 + $0x2c] sm:$0xf]
    %v1591 = vld [vmem:[%s1578 + $0x30] sm:$0xf]
    %v1592 = vld [vmem:[%s1578 + $0x34] sm:$0xf]
    %v1593 = vld [vmem:[%s1578 + $0x38] sm:$0xf]
    %v1594 = vld [vmem:[%s1578 + $0x3c] sm:$0xf]
    %s1595 = scalar_lea.vmem %s7, 1
    %v1596 = vld [vmem:[%s1595] sm:$0x1]
    %v1598 = vperm.slane %v1596, 0
    %v1602 = vunpack.c.l.b16 %v1576
    %v1603 = vunpack.c.l.b16 %v1577
    %v1604 = vpack.c.b16 %v1603, %v1602
    %v1622 = vunpack.c.l.b16 %v1579
    %v1623 = vunpack.c.l.b16 %v1580
    %v1624 = vunpack.c.l.b16 %v1581
    %v1625 = vunpack.c.l.b16 %v1582
    %v1626 = vunpack.c.l.b16 %v1583
    %v1627 = vunpack.c.l.b16 %v1584
    %v1628 = vunpack.c.l.b16 %v1585
    %v1629 = vunpack.c.l.b16 %v1586
    %v1630 = vunpack.c.l.b16 %v1587
    %v1631 = vunpack.c.l.b16 %v1588
    %v1632 = vunpack.c.l.b16 %v1589
    %v1633 = vunpack.c.l.b16 %v1590
    %v1634 = vunpack.c.l.b16 %v1591
    %v1635 = vunpack.c.l.b16 %v1592
    %v1636 = vunpack.c.l.b16 %v1593
    %v1637 = vunpack.c.l.b16 %v1594
    %v1638 = vpack.c.b16 %v1623, %v1622
    %v1639 = vpack.c.b16 %v1625, %v1624
    %v1640 = vpack.c.b16 %v1627, %v1626
    %v1641 = vpack.c.b16 %v1629, %v1628
    %v1642 = vpack.c.b16 %v1631, %v1630
    %v1643 = vpack.c.b16 %v1633, %v1632
    %v1644 = vpack.c.b16 %v1635, %v1634
    %v1645 = vpack.c.b16 %v1637, %v1636
    %1654 = vmatpush.bf16.msra.mxu0 %v1645
    %1655 = vmatpush.bf16.msra.mxu0 %v1644
    %1656 = vmatpush.bf16.msra.mxu0 %v1643
    %1657 = vmatpush.bf16.msra.mxu0 %v1642
    %1658 = vmatpush.bf16.msra.mxu0 %v1641
    %1659 = vmatpush.bf16.msra.mxu0 %v1640
    %1660 = vmatpush.bf16.msra.mxu0 %v1639
    %1661 = vmatpush.bf16.msra.mxu0 %v1638
    %1662 = vmatmul.bf16.gmra.mxu0 %v1604
    %v1663 = vpop.f32.mrf.mxu0
    %v1664 = vadd.f32 %v1598, %v1663
    %v1665 = vpop.f32.mrf.mxu0
    %v1666 = vadd.f32 %v1598, %v1665
    %1667 = vdwg.mxu0
    %v1668 = vunpack.c.l.bf16 %v1147
    %v1669 = vunpack.c.l.bf16 %v1148
    %v1670 = vadd.f32 %v1664, %v1668
    %v1671 = vadd.f32 %v1666, %v1669
    %s1672 = scalar_lea.vmem %s8, 1
    %v1673 = vld [vmem:[%s1672] sm:$0x1]
    %s1674 = scalar_lea.vmem %s9, 1
    %v1675 = vld [vmem:[%s1674] sm:$0x1]
    %1676 = vadd.xlane.f32.xlu0 %v1670
    %v1677 = vpop.xlane.xlu0 %1676
    %1678 = vadd.xlane.f32.xlu0 %v1671
    %v1679 = vpop.xlane.xlu0 %1678
    %v1680 = vmul.f32 %v1677, %v131
    %v1681 = vmul.f32 %v1679, %v131
    %v1682 = vsub.f32 %v1670, %v1680
    %v1683 = vsub.f32 %v1671, %v1681
    %v1684 = vmul.f32 %v1682, %v1682
    %v1685 = vmul.f32 %v1683, %v1683
    %1686 = vadd.xlane.f32.xlu0 %v1684
    %v1687 = vpop.xlane.xlu0 %1686
    %1688 = vadd.xlane.f32.xlu0 %v1685
    %v1689 = vpop.xlane.xlu0 %1688
    %v1690 = vmul.f32 %v1687, %v131
    %v1691 = vmul.f32 %v1689, %v131
    %v1692 = vadd.f32 %v1690, 1e-12
    %v1693 = vadd.f32 %v1691, 1e-12
    %v1694 = vrsqrt.pop %v1692
    %v1695 = vmul.f32 %v1694, %v1692
    %v1696 = vmul.f32 %v1695, %v1694
    %v1697 = vmul.f32 0.5, %v1696
    %v1698 = vsub.f32 1.5, %v1697
    %v1699 = vmul.f32 %v1694, %v1698
    %vm1700 = vweird.f32 %v1692
    %vm1701 = vweird.f32 %v1694
    %vm1702 = vmor %vm1700, %vm1701
    %v1703 = vsel %vm1702, %v1694, %v1699
    %v1704 = vrsqrt.pop %v1693
    %v1705 = vmul.f32 %v1704, %v1693
    %v1706 = vmul.f32 %v1705, %v1704
    %v1707 = vmul.f32 0.5, %v1706
    %v1708 = vsub.f32 1.5, %v1707
    %v1709 = vmul.f32 %v1704, %v1708
    %vm1710 = vweird.f32 %v1693
    %vm1711 = vweird.f32 %v1704
    %vm1712 = vmor %vm1710, %vm1711
    %v1713 = vsel %vm1712, %v1704, %v1709
    %v1714 = vmul.f32 %v1682, %v1703
    %v1715 = vmul.f32 %v1683, %v1713
    %v1717 = vperm.slane %v1673, 0
    %v1719 = vmul.f32 %v1714, %v1717
    %v1720 = vmul.f32 %v1715, %v1717
    %v1722 = vperm.slane %v1675, 0
    %v1724 = vadd.f32 %v1719, %v1722
    %v1725 = vadd.f32 %v1720, %v1722
    %v1726 = vpack.c.bf16 %v1724, %v1724
    %v1727 = vpack.c.bf16 %v1725, %v1725
    %s1728 = scalar_lea.vmem [#allocation7], 128
    %v1729 = vld [vmem:[%s1728] sm:$0xff]
    %v1730 = vld [vmem:[%s1728 + $0x8] sm:$0xff]
    %v1731 = vld [vmem:[%s1728 + $0x10] sm:$0xff]
    %v1732 = vld [vmem:[%s1728 + $0x18] sm:$0xff]
    %v1733 = vld [vmem:[%s1728 + $0x20] sm:$0xff]
    %v1734 = vld [vmem:[%s1728 + $0x28] sm:$0xff]
    %v1735 = vld [vmem:[%s1728 + $0x30] sm:$0xff]
    %v1736 = vld [vmem:[%s1728 + $0x38] sm:$0xff]
    %v1737 = vld [vmem:[%s1728 + $0x40] sm:$0xff]
    %v1738 = vld [vmem:[%s1728 + $0x48] sm:$0xff]
    %v1739 = vld [vmem:[%s1728 + $0x50] sm:$0xff]
    %v1740 = vld [vmem:[%s1728 + $0x58] sm:$0xff]
    %v1741 = vld [vmem:[%s1728 + $0x60] sm:$0xff]
    %v1742 = vld [vmem:[%s1728 + $0x68] sm:$0xff]
    %v1743 = vld [vmem:[%s1728 + $0x70] sm:$0xff]
    %v1744 = vld [vmem:[%s1728 + $0x78] sm:$0xff]
    %s1745 = scalar_lea.vmem %s11, 2
    %v1746 = vld [vmem:[%s1745] sm:$0x3]
    %v1748 = vperm.slane %v1746, 0
    %v1749 = vperm.slane %v1746, 1
    %v1754 = vunpack.c.l.b16 %v1726
    %v1755 = vunpack.c.l.b16 %v1727
    %v1756 = vpack.c.b16 %v1755, %v1754
    %v1774 = vunpack.c.l.b16 %v1729
    %v1775 = vunpack.c.h.b16 %v1729
    %v1776 = vunpack.c.l.b16 %v1730
    %v1777 = vunpack.c.h.b16 %v1730
    %v1778 = vunpack.c.l.b16 %v1731
    %v1779 = vunpack.c.h.b16 %v1731
    %v1780 = vunpack.c.l.b16 %v1732
    %v1781 = vunpack.c.h.b16 %v1732
    %v1782 = vunpack.c.l.b16 %v1733
    %v1783 = vunpack.c.h.b16 %v1733
    %v1784 = vunpack.c.l.b16 %v1734
    %v1785 = vunpack.c.h.b16 %v1734
    %v1786 = vunpack.c.l.b16 %v1735
    %v1787 = vunpack.c.h.b16 %v1735
    %v1788 = vunpack.c.l.b16 %v1736
    %v1789 = vunpack.c.h.b16 %v1736
    %v1790 = vunpack.c.l.b16 %v1737
    %v1791 = vunpack.c.h.b16 %v1737
    %v1792 = vunpack.c.l.b16 %v1738
    %v1793 = vunpack.c.h.b16 %v1738
    %v1794 = vunpack.c.l.b16 %v1739
    %v1795 = vunpack.c.h.b16 %v1739
    %v1796 = vunpack.c.l.b16 %v1740
    %v1797 = vunpack.c.h.b16 %v1740
    %v1798 = vunpack.c.l.b16 %v1741
    %v1799 = vunpack.c.h.b16 %v1741
    %v1800 = vunpack.c.l.b16 %v1742
    %v1801 = vunpack.c.h.b16 %v1742
    %v1802 = vunpack.c.l.b16 %v1743
    %v1803 = vunpack.c.h.b16 %v1743
    %v1804 = vunpack.c.l.b16 %v1744
    %v1805 = vunpack.c.h.b16 %v1744
    %v1806 = vpack.c.b16 %v1776, %v1774
    %v1807 = vpack.c.b16 %v1777, %v1775
    %v1808 = vpack.c.b16 %v1780, %v1778
    %v1809 = vpack.c.b16 %v1781, %v1779
    %v1810 = vpack.c.b16 %v1784, %v1782
    %v1811 = vpack.c.b16 %v1785, %v1783
    %v1812 = vpack.c.b16 %v1788, %v1786
    %v1813 = vpack.c.b16 %v1789, %v1787
    %v1814 = vpack.c.b16 %v1792, %v1790
    %v1815 = vpack.c.b16 %v1793, %v1791
    %v1816 = vpack.c.b16 %v1796, %v1794
    %v1817 = vpack.c.b16 %v1797, %v1795
    %v1818 = vpack.c.b16 %v1800, %v1798
    %v1819 = vpack.c.b16 %v1801, %v1799
    %v1820 = vpack.c.b16 %v1804, %v1802
    %v1821 = vpack.c.b16 %v1805, %v1803
    %1838 = vmatpush.bf16.msra.mxu0 %v1820
    %1839 = vmatpush.bf16.msra.mxu0 %v1818
    %1840 = vmatpush.bf16.msra.mxu0 %v1816
    %1841 = vmatpush.bf16.msra.mxu0 %v1814
    %1842 = vmatpush.bf16.msra.mxu0 %v1812
    %1843 = vmatpush.bf16.msra.mxu0 %v1810
    %1844 = vmatpush.bf16.msra.mxu0 %v1808
    %1845 = vmatpush.bf16.msra.mxu0 %v1806
    %1846 = vmatmul.bf16.gmra.mxu0 %v1756
    %v1847 = vpop.f32.mrf.mxu0
    %v1848 = vadd.f32 %v1748, %v1847
    %v1849 = vpop.f32.mrf.mxu0
    %v1850 = vadd.f32 %v1748, %v1849
    %1851 = vdwg.mxu0
    %1852 = vmatpush.bf16.msra.mxu0 %v1821
    %1853 = vmatpush.bf16.msra.mxu0 %v1819
    %1854 = vmatpush.bf16.msra.mxu0 %v1817
    %1855 = vmatpush.bf16.msra.mxu0 %v1815
    %1856 = vmatpush.bf16.msra.mxu0 %v1813
    %1857 = vmatpush.bf16.msra.mxu0 %v1811
    %1858 = vmatpush.bf16.msra.mxu0 %v1809
    %1859 = vmatpush.bf16.msra.mxu0 %v1807
    %1860 = vmatmul.bf16.gmra.mxu0 %v1756
    %v1861 = vpop.f32.mrf.mxu0
    %v1862 = vadd.f32 %v1749, %v1861
    %v1863 = vpop.f32.mrf.mxu0
    %v1864 = vadd.f32 %v1749, %v1863
    %1865 = vdwg.mxu0
    %v1866 = vmul.f32 %v1848, 0.5
    %v1867 = vmul.f32 %v1862, 0.5
    %v1868 = vmul.f32 %v1850, 0.5
    %v1869 = vmul.f32 %v1864, 0.5
    %v1870 = vmul.f32 %v1848, 0.044715
    %v1871 = vmul.f32 %v1862, 0.044715
    %v1872 = vmul.f32 %v1850, 0.044715
    %v1873 = vmul.f32 %v1864, 0.044715
    %v1874 = vmul.f32 %v1870, %v1848
    %v1875 = vmul.f32 %v1871, %v1862
    %v1876 = vmul.f32 %v1872, %v1850
    %v1877 = vmul.f32 %v1873, %v1864
    %v1878 = vmul.f32 %v1874, %v1848
    %v1879 = vmul.f32 %v1875, %v1862
    %v1880 = vmul.f32 %v1876, %v1850
    %v1881 = vmul.f32 %v1877, %v1864
    %v1882 = vadd.f32 %v1848, %v1878
    %v1883 = vadd.f32 %v1862, %v1879
    %v1884 = vadd.f32 %v1850, %v1880
    %v1885 = vadd.f32 %v1864, %v1881
    %v1886 = vmul.f32 %v1882, 0.7978846
    %v1887 = vmul.f32 %v1883, 0.7978846
    %v1888 = vmul.f32 %v1884, 0.7978846
    %v1889 = vmul.f32 %v1885, 0.7978846
    %v1890 = vtanh.pop %v1886
    %v1891 = vtanh.pop %v1887
    %v1892 = vtanh.pop %v1888
    %v1893 = vtanh.pop %v1889
    %v1894 = vadd.f32 %v1890, 1.0
    %v1895 = vadd.f32 %v1891, 1.0
    %v1896 = vadd.f32 %v1892, 1.0
    %v1897 = vadd.f32 %v1893, 1.0
    %v1898 = vmul.f32 %v1866, %v1894
    %v1899 = vmul.f32 %v1867, %v1895
    %v1900 = vmul.f32 %v1868, %v1896
    %v1901 = vmul.f32 %v1869, %v1897
    %v1902 = vpack.c.bf16 %v1900, %v1898
    %v1903 = vpack.c.bf16 %v1901, %v1899
    %s1904 = scalar_lea.vmem [#allocation9], 128
    %v1905 = vld [vmem:[%s1904] sm:$0xf]
    %v1906 = vld [vmem:[%s1904 + $0x4] sm:$0xf]
    %v1907 = vld [vmem:[%s1904 + $0x8] sm:$0xf]
    %v1908 = vld [vmem:[%s1904 + $0xc] sm:$0xf]
    %v1909 = vld [vmem:[%s1904 + $0x10] sm:$0xf]
    %v1910 = vld [vmem:[%s1904 + $0x14] sm:$0xf]
    %v1911 = vld [vmem:[%s1904 + $0x18] sm:$0xf]
    %v1912 = vld [vmem:[%s1904 + $0x1c] sm:$0xf]
    %v1913 = vld [vmem:[%s1904 + $0x20] sm:$0xf]
    %v1914 = vld [vmem:[%s1904 + $0x24] sm:$0xf]
    %v1915 = vld [vmem:[%s1904 + $0x28] sm:$0xf]
    %v1916 = vld [vmem:[%s1904 + $0x2c] sm:$0xf]
    %v1917 = vld [vmem:[%s1904 + $0x30] sm:$0xf]
    %v1918 = vld [vmem:[%s1904 + $0x34] sm:$0xf]
    %v1919 = vld [vmem:[%s1904 + $0x38] sm:$0xf]
    %v1920 = vld [vmem:[%s1904 + $0x3c] sm:$0xf]
    %v1921 = vld [vmem:[%s1904 + $0x40] sm:$0xf]
    %v1922 = vld [vmem:[%s1904 + $0x44] sm:$0xf]
    %v1923 = vld [vmem:[%s1904 + $0x48] sm:$0xf]
    %v1924 = vld [vmem:[%s1904 + $0x4c] sm:$0xf]
    %v1925 = vld [vmem:[%s1904 + $0x50] sm:$0xf]
    %v1926 = vld [vmem:[%s1904 + $0x54] sm:$0xf]
    %v1927 = vld [vmem:[%s1904 + $0x58] sm:$0xf]
    %v1928 = vld [vmem:[%s1904 + $0x5c] sm:$0xf]
    %v1929 = vld [vmem:[%s1904 + $0x60] sm:$0xf]
    %v1930 = vld [vmem:[%s1904 + $0x64] sm:$0xf]
    %v1931 = vld [vmem:[%s1904 + $0x68] sm:$0xf]
    %v1932 = vld [vmem:[%s1904 + $0x6c] sm:$0xf]
    %v1933 = vld [vmem:[%s1904 + $0x70] sm:$0xf]
    %v1934 = vld [vmem:[%s1904 + $0x74] sm:$0xf]
    %v1935 = vld [vmem:[%s1904 + $0x78] sm:$0xf]
    %v1936 = vld [vmem:[%s1904 + $0x7c] sm:$0xf]
    %s1937 = scalar_lea.vmem %s13, 1
    %v1938 = vld [vmem:[%s1937] sm:$0x1]
    %v1940 = vperm.slane %v1938, 0
    %v1974 = vunpack.c.l.b16 %v1905
    %v1975 = vunpack.c.l.b16 %v1906
    %v1976 = vunpack.c.l.b16 %v1907
    %v1977 = vunpack.c.l.b16 %v1908
    %v1978 = vunpack.c.l.b16 %v1909
    %v1979 = vunpack.c.l.b16 %v1910
    %v1980 = vunpack.c.l.b16 %v1911
    %v1981 = vunpack.c.l.b16 %v1912
    %v1982 = vunpack.c.l.b16 %v1913
    %v1983 = vunpack.c.l.b16 %v1914
    %v1984 = vunpack.c.l.b16 %v1915
    %v1985 = vunpack.c.l.b16 %v1916
    %v1986 = vunpack.c.l.b16 %v1917
    %v1987 = vunpack.c.l.b16 %v1918
    %v1988 = vunpack.c.l.b16 %v1919
    %v1989 = vunpack.c.l.b16 %v1920
    %v1990 = vunpack.c.l.b16 %v1921
    %v1991 = vunpack.c.l.b16 %v1922
    %v1992 = vunpack.c.l.b16 %v1923
    %v1993 = vunpack.c.l.b16 %v1924
    %v1994 = vunpack.c.l.b16 %v1925
    %v1995 = vunpack.c.l.b16 %v1926
    %v1996 = vunpack.c.l.b16 %v1927
    %v1997 = vunpack.c.l.b16 %v1928
    %v1998 = vunpack.c.l.b16 %v1929
    %v1999 = vunpack.c.l.b16 %v1930
    %v2000 = vunpack.c.l.b16 %v1931
    %v2001 = vunpack.c.l.b16 %v1932
    %v2002 = vunpack.c.l.b16 %v1933
    %v2003 = vunpack.c.l.b16 %v1934
    %v2004 = vunpack.c.l.b16 %v1935
    %v2005 = vunpack.c.l.b16 %v1936
    %v2006 = vpack.c.b16 %v1975, %v1974
    %v2007 = vpack.c.b16 %v1977, %v1976
    %v2008 = vpack.c.b16 %v1979, %v1978
    %v2009 = vpack.c.b16 %v1981, %v1980
    %v2010 = vpack.c.b16 %v1983, %v1982
    %v2011 = vpack.c.b16 %v1985, %v1984
    %v2012 = vpack.c.b16 %v1987, %v1986
    %v2013 = vpack.c.b16 %v1989, %v1988
    %v2014 = vpack.c.b16 %v1991, %v1990
    %v2015 = vpack.c.b16 %v1993, %v1992
    %v2016 = vpack.c.b16 %v1995, %v1994
    %v2017 = vpack.c.b16 %v1997, %v1996
    %v2018 = vpack.c.b16 %v1999, %v1998
    %v2019 = vpack.c.b16 %v2001, %v2000
    %v2020 = vpack.c.b16 %v2003, %v2002
    %v2021 = vpack.c.b16 %v2005, %v2004
    %2038 = vmatpush.bf16.msra.mxu0 %v2013
    %2039 = vmatpush.bf16.msra.mxu0 %v2012
    %2040 = vmatpush.bf16.msra.mxu0 %v2011
    %2041 = vmatpush.bf16.msra.mxu0 %v2010
    %2042 = vmatpush.bf16.msra.mxu0 %v2009
    %2043 = vmatpush.bf16.msra.mxu0 %v2008
    %2044 = vmatpush.bf16.msra.mxu0 %v2007
    %2045 = vmatpush.bf16.msra.mxu0 %v2006
    %2046 = vmatmul.bf16.gmra.mxu0 %v1902
    %v2047 = vpop.f32.mrf.mxu0
    %v2048 = vadd.f32 %v1940, %v2047
    %v2049 = vpop.f32.mrf.mxu0
    %v2050 = vadd.f32 %v1940, %v2049
    %2051 = vdwg.mxu0
    %2052 = vmatpush.bf16.msra.mxu0 %v2021
    %2053 = vmatpush.bf16.msra.mxu0 %v2020
    %2054 = vmatpush.bf16.msra.mxu0 %v2019
    %2055 = vmatpush.bf16.msra.mxu0 %v2018
    %2056 = vmatpush.bf16.msra.mxu0 %v2017
    %2057 = vmatpush.bf16.msra.mxu0 %v2016
    %2058 = vmatpush.bf16.msra.mxu0 %v2015
    %2059 = vmatpush.bf16.msra.mxu0 %v2014
    %2060 = vmatmul.bf16.gmra.mxu0 %v1903
    %v2061 = vpop.f32.mrf.mxu0
    %v2062 = vadd.f32 %v2048, %v2061
    %v2063 = vpop.f32.mrf.mxu0
    %v2064 = vadd.f32 %v2050, %v2063
    %2065 = vdwg.mxu0
    %v2066 = vunpack.c.l.bf16 %v1726
    %v2067 = vunpack.c.l.bf16 %v1727
    %v2068 = vadd.f32 %v2062, %v2066
    %v2069 = vadd.f32 %v2064, %v2067
    %s2070 = scalar_lea.vmem %s14, 1
    %v2071 = vld [vmem:[%s2070] sm:$0x1]
    %s2072 = scalar_lea.vmem %s15, 1
    %v2073 = vld [vmem:[%s2072] sm:$0x1]
    %2074 = vadd.xlane.f32.xlu0 %v2068
    %v2075 = vpop.xlane.xlu0 %2074
    %2076 = vadd.xlane.f32.xlu0 %v2069
    %v2077 = vpop.xlane.xlu0 %2076
    %v2078 = vmul.f32 %v2075, %v131
    %v2079 = vmul.f32 %v2077, %v131
    %v2080 = vsub.f32 %v2068, %v2078
    %v2081 = vsub.f32 %v2069, %v2079
    %v2082 = vmul.f32 %v2080, %v2080
    %v2083 = vmul.f32 %v2081, %v2081
    %2084 = vadd.xlane.f32.xlu0 %v2082
    %v2085 = vpop.xlane.xlu0 %2084
    %2086 = vadd.xlane.f32.xlu0 %v2083
    %v2087 = vpop.xlane.xlu0 %2086
    %v2088 = vmul.f32 %v2085, %v131
    %v2089 = vmul.f32 %v2087, %v131
    %v2090 = vadd.f32 %v2088, 1e-12
    %v2091 = vadd.f32 %v2089, 1e-12
    %v2092 = vrsqrt.pop %v2090
    %v2093 = vmul.f32 %v2092, %v2090
    %v2094 = vmul.f32 %v2093, %v2092
    %v2095 = vmul.f32 0.5, %v2094
    %v2096 = vsub.f32 1.5, %v2095
    %v2097 = vmul.f32 %v2092, %v2096
    %vm2098 = vweird.f32 %v2090
    %vm2099 = vweird.f32 %v2092
    %vm2100 = vmor %vm2098, %vm2099
    %v2101 = vsel %vm2100, %v2092, %v2097
    %v2102 = vrsqrt.pop %v2091
    %v2103 = vmul.f32 %v2102, %v2091
    %v2104 = vmul.f32 %v2103, %v2102
    %v2105 = vmul.f32 0.5, %v2104
    %v2106 = vsub.f32 1.5, %v2105
    %v2107 = vmul.f32 %v2102, %v2106
    %vm2108 = vweird.f32 %v2091
    %vm2109 = vweird.f32 %v2102
    %vm2110 = vmor %vm2108, %vm2109
    %v2111 = vsel %vm2110, %v2102, %v2107
    %v2112 = vmul.f32 %v2080, %v2101
    %v2113 = vmul.f32 %v2081, %v2111
    %v2115 = vperm.slane %v2071, 0
    %v2117 = vmul.f32 %v2112, %v2115
    %v2118 = vmul.f32 %v2113, %v2115
    %v2120 = vperm.slane %v2073, 0
    %v2122 = vadd.f32 %v2117, %v2120
    %v2123 = vadd.f32 %v2118, %v2120
    %v2124 = vpack.c.bf16 %v2122, %v2122
    %v2125 = vpack.c.bf16 %v2123, %v2123
    %v2126 = vunpack.c.l.bf16 %v2124
    %v2127 = vunpack.c.l.bf16 %v2125
    %2128 = vst [vmem:[#allocation3] sm:$0xff] %v2126
    %2129 = vst [vmem:[#allocation3 + $0x8] sm:$0xff] %v2127
    %v2130 = vld [vmem:[#allocation3] ss:$8 sm:$0x3]
    %v2131 = vpack.c.bf16 %v2130, %v2130
    %v2132 = vld [vmem:[%s16] sm:$0xf]
    %v2133 = vld [vmem:[%s16 + $0x4] sm:$0xf]
    %v2134 = vld [vmem:[%s16 + $0x8] sm:$0xf]
    %v2135 = vld [vmem:[%s16 + $0xc] sm:$0xf]
    %v2136 = vld [vmem:[%s16 + $0x10] sm:$0xf]
    %v2137 = vld [vmem:[%s16 + $0x14] sm:$0xf]
    %v2138 = vld [vmem:[%s16 + $0x18] sm:$0xf]
    %v2139 = vld [vmem:[%s16 + $0x1c] sm:$0xf]
    %v2140 = vld [vmem:[%s16 + $0x20] sm:$0xf]
    %v2141 = vld [vmem:[%s16 + $0x24] sm:$0xf]
    %v2142 = vld [vmem:[%s16 + $0x28] sm:$0xf]
    %v2143 = vld [vmem:[%s16 + $0x2c] sm:$0xf]
    %v2144 = vld [vmem:[%s16 + $0x30] sm:$0xf]
    %v2145 = vld [vmem:[%s16 + $0x34] sm:$0xf]
    %v2146 = vld [vmem:[%s16 + $0x38] sm:$0xf]
    %v2147 = vld [vmem:[%s16 + $0x3c] sm:$0xf]
    %v2148 = vld [vmem:[%s17] sm:$0x1]
    %v2150 = vperm.slane %v2148, 0
    %v2168 = vunpack.c.l.b16 %v2132
    %v2169 = vunpack.c.l.b16 %v2133
    %v2170 = vunpack.c.l.b16 %v2134
    %v2171 = vunpack.c.l.b16 %v2135
    %v2172 = vunpack.c.l.b16 %v2136
    %v2173 = vunpack.c.l.b16 %v2137
    %v2174 = vunpack.c.l.b16 %v2138
    %v2175 = vunpack.c.l.b16 %v2139
    %v2176 = vunpack.c.l.b16 %v2140
    %v2177 = vunpack.c.l.b16 %v2141
    %v2178 = vunpack.c.l.b16 %v2142
    %v2179 = vunpack.c.l.b16 %v2143
    %v2180 = vunpack.c.l.b16 %v2144
    %v2181 = vunpack.c.l.b16 %v2145
    %v2182 = vunpack.c.l.b16 %v2146
    %v2183 = vunpack.c.l.b16 %v2147
    %v2184 = vpack.c.b16 %v2169, %v2168
    %v2185 = vpack.c.b16 %v2171, %v2170
    %v2186 = vpack.c.b16 %v2173, %v2172
    %v2187 = vpack.c.b16 %v2175, %v2174
    %v2188 = vpack.c.b16 %v2177, %v2176
    %v2189 = vpack.c.b16 %v2179, %v2178
    %v2190 = vpack.c.b16 %v2181, %v2180
    %v2191 = vpack.c.b16 %v2183, %v2182
    %2200 = vmatpush.bf16.msra.mxu0 %v2191
    %2201 = vmatpush.bf16.msra.mxu0 %v2190
    %2202 = vmatpush.bf16.msra.mxu0 %v2189
    %2203 = vmatpush.bf16.msra.mxu0 %v2188
    %2204 = vmatpush.bf16.msra.mxu0 %v2187
    %2205 = vmatpush.bf16.msra.mxu0 %v2186
    %2206 = vmatpush.bf16.msra.mxu0 %v2185
    %2207 = vmatpush.bf16.msra.mxu0 %v2184
    %2208 = vmatmul.bf16.gmra.mxu0 %v2131
    %v2209 = vpop.f32.mrf.mxu0
    %v2210 = vadd.f32 %v2150, %v2209
    %v2211 = vpop.f32.mrf.mxu0
    %2212 = vdwg.mxu0
    %v2213 = vtanh.pop %v2210
    %v2214 = vld [vmem:[%s18] sm:$0x1]
    %v2216 = vperm.slane %v2214, 0
    %v2218 = vmul.f32 %v2213, %v2216
    %vm2219 = vcmask 1041408
    %v2220 = vsel %vm2219, %v2218, 0.0
    %2221 = vadd.xlane.f32.xlu0 %v2220
    %v2222 = vpop.xlane.xlu0 %2221
    %v2223 = vld [vmem:[#allocation4] sm:$0x1]
    %v2225 = vperm.slane %v2223, 0
    %v2227 = vadd.f32 %v2222, %v2225
    %v2228 = vsub.f32 0.0, %v2227
    %v2229 = vmul.f32 %v2228, 1.442695
    %v2230 = vpow.pop %v2229
    %v2231 = vadd.f32 %v2230, 1.0
    %v2232 = vrcp.pop %v2231
    %v2233 = vmul.f32 %v2231, %v2232
    %v2234 = vsub.f32 1.0, %v2233
    %v2235 = vmul.f32 %v2232, %v2234
    %v2236 = vadd.f32 %v2232, %v2235
    %vm2237 = vweird.f32 %v2231
    %vm2238 = vweird.f32 %v2232
    %vm2239 = vmor %vm2237, %vm2238
    %v2240 = vsel %vm2239, %v2232, %v2236
    %v2241 = vand.u32 2147483647, %v2231
    %vm2242 = vcmp.eq.f32.partialorder %v2241, 8.507059e+37
    %v2243 = vand.u32 %v2231, 2147483648
    %v2244 = vor.u32 1.1754944e-38, %v2243
    %v2245 = vsel %vm2242, %v2244, %v2240
    %v2246 = vmul.f32 5.0, %v2245
    %2248 = vset.pattern.permute.xlu0 0
    %2249 = vperm.xlu0 %2248, %v2246
    %v2250 = vpop.permute.xlu0 %2249
    %2252 = vst [vmem:[%s20] sm:$0x3] %v2250
    // Predicated region
    $region94: #{bert_regressor_forward.1} parent=1 // pred_check
      _
    $region95: #{bert_regressor_forward.1} parent=1 // pred_check_branch
      %2254 = sbr.rel (0) target = $region97
    $region96: #{bert_regressor_forward.1} parent=1 // pred_region
      _
    $region97: #{bert_regressor_forward.1} parent=1 // pred_fallthru
      _
    // Predicated region
    $region98: #{bert_regressor_forward.1} parent=1 // pred_check
      _
    $region99: #{bert_regressor_forward.1} parent=1 // pred_check_branch
      %2256 = sbr.rel (0) target = $region101
    $region100: #{bert_regressor_forward.1} parent=1 // pred_region
      _
    $region101: #{bert_regressor_forward.1} parent=1 // pred_fallthru
      _
    %2257 = vsyncpa [#allocation6], 1
    %2258 = vsyncpa [#allocation8], 1

</llo_original>
